<compile_context>
chip_gen: v7x
topology: tpu7x:2x2x1
jax: 0.10.0
libtpu: 0.0.40
codegen_flags: <defaults>
</compile_context>

<pallas_src>
import math

import numpy as np
import jax
import jax.numpy as jnp
from jax.experimental import pallas as pl
from jax.experimental.pallas import tpu as pltpu

_LN_2PI = math.log(2.0 * math.pi)
_EPS_VAR = 1e-4   # eps added to exp(z_var_fc(q)) in encode()
_EPS_ZINB = 1e-8  # eps used inside the ZINB log-likelihood


# ----------------------------- in-kernel helpers ----------------------------------- #
def _softplus(x):
    return jnp.maximum(x, 0.0) + jnp.log(1.0 + jnp.exp(-jnp.abs(x)))


def _lgamma(z):
    """log Gamma(z) for z > 0.

    Shift the argument up by 8 via lgamma(z) = lgamma(z+8) - log(z*(z+1)*...*(z+7)),
    then apply the Stirling series.  The shift product is split into two 4-term
    products so it cannot overflow f32 for realistic count/theta values while only
    needing 2 EUP logs (vs. 8 serial logs before)."""
    p0 = z * (z + 1.0) * (z + 2.0) * (z + 3.0)
    p1 = (z + 4.0) * (z + 5.0) * (z + 6.0) * (z + 7.0)
    shift = jnp.log(p0) + jnp.log(p1)
    w = z + 8.0
    inv = pl.reciprocal(w, approx=True)
    inv2 = inv * inv
    series = inv * (1.0 / 12.0 - inv2 * (1.0 / 360.0 - inv2 * (1.0 / 1260.0)))
    return (w - 0.5) * jnp.log(w) - w + 0.5 * _LN_2PI + series - shift


# --------------------------------- the kernel -------------------------------------- #
def _base_vae_forward_kernel(
    # inputs (per-batch tiles)
    x_sm_ref, x_st_ref, lgx1_ref, noise_ref,
    # weights (VMEM-resident across grid steps)
    w_esm_ref, b_esm_ref, w_est_ref, b_est_ref,
    w_mv_sm_ref, w_mv_st_ref, b_mv_ref,
    w_dec_ref, b_dec_ref,
    w_sth_ref, b_sth_ref, w_smh_ref, b_smh_ref,
    # outputs
    q_ref, q_mu_ref, q_var_ref, z_ref, px_ref,
    st_heads_ref, sm_heads_ref,
    kld_ref, loss_st_ref, loss_sm_ref,
):
    f32 = jnp.float32
    bf16 = jnp.bfloat16

    x_sm = x_sm_ref[...]               # (TB, D_SM) raw SM features, f32
    x_st = x_st_ref[...]               # (TB, D_ST) raw ST counts,  f32
    d_sm = x_sm.shape[1]
    d_st = x_st.shape[1]
    n_latent = noise_ref.shape[1]

    x_st_log = jnp.log(x_st + 1.0)     # torch.log(X_ST + 1)

    # ---------------- encoders: Linear (bf16 in, f32 acc) -> folded BN(eval) -> ReLU
    q_sm = jnp.maximum(
        jnp.dot(x_sm.astype(bf16), w_esm_ref[...],
                preferred_element_type=f32) + b_esm_ref[...], 0.0)
    q_st = jnp.maximum(
        jnp.dot(x_st_log.astype(bf16), w_est_ref[...],
                preferred_element_type=f32) + b_est_ref[...], 0.0)
    q_ref[...] = jnp.concatenate([q_sm, q_st], axis=1)   # q = hstack(q_sm, q_st)

    # ---------------- fused z_mean / z_var heads: one (H, 2L) matmul per branch -----
    mv = (jnp.dot(q_sm.astype(bf16), w_mv_sm_ref[...], preferred_element_type=f32)
          + jnp.dot(q_st.astype(bf16), w_mv_st_ref[...], preferred_element_type=f32)
          + b_mv_ref[...])
    q_mu = mv[:, :n_latent]
    q_var = jnp.exp(mv[:, n_latent:]) + _EPS_VAR
    z = q_mu + jnp.sqrt(q_var) * noise_ref[...]          # Normal(mu, sqrt(var)).rsample()
    q_mu_ref[...] = q_mu
    q_var_ref[...] = q_var
    z_ref[...] = z

    # --------- KL( N(q_mu, sqrt(q_var)) || N(0,1) ).sum(dim=1) ---------
    kld = 0.5 * (q_var + q_mu * q_mu - 1.0) - 0.5 * jnp.log(q_var)
    kld_ref[...] = jnp.sum(kld, axis=1, keepdims=True)

    # ---------------- decoder: Linear -> folded BN(eval) -> ReLU ----------------
    px = jnp.maximum(
        jnp.dot(z.astype(bf16), w_dec_ref[...],
                preferred_element_type=f32) + b_dec_ref[...], 0.0)
    px_ref[...] = px

    # lib_size = X_ST.sum(1) (raw counts)
    lib = jnp.sum(x_st, axis=1, keepdims=True)           # (TB, 1)

    # ---------------- fused output heads: one matmul per modality ----------------
    px_bf = px.astype(bf16)
    st = jnp.dot(px_bf, w_sth_ref[...], preferred_element_type=f32) + b_sth_ref[...]
    sm = jnp.dot(px_bf, w_smh_ref[...], preferred_element_type=f32) + b_smh_ref[...]

    rs_logits = st[:, :d_st]
    px_rna_rate = st[:, d_st:2 * d_st]
    px_rna_dropout = st[:, 2 * d_st:]

    rs_logits = rs_logits - jnp.max(rs_logits, axis=1, keepdims=True)
    rs_exp = jnp.exp(rs_logits)
    inv_den = pl.reciprocal(jnp.sum(rs_exp, axis=1, keepdims=True), approx=True)
    px_rna_scale = rs_exp * inv_den * lib                # softmax * lib_size

    st_heads_ref[...] = jnp.concatenate([px_rna_scale, st[:, d_st:]], axis=1)
    sm_heads_ref[...] = sm                               # raw [scale | rate | dropout]

    px_sm_scale = sm[:, :d_sm]
    px_sm_rate = sm[:, d_sm:2 * d_sm]

    # ---------------- ZINB reconstruction loss (ST), reduction='sum' over genes -----
    x = x_st
    mu = px_rna_scale
    theta = jnp.exp(px_rna_rate)
    pi = px_rna_dropout
    softplus_pi = _softplus(-pi)
    log_theta_eps = jnp.log(theta + _EPS_ZINB)
    log_theta_mu_eps = jnp.log(theta + mu + _EPS_ZINB)
    pi_theta_log = -pi + theta * (log_theta_eps - log_theta_mu_eps)
    case_zero = _softplus(pi_theta_log) - softplus_pi
    mul_case_zero = jnp.where(x < _EPS_ZINB, case_zero, 0.0)
    case_non_zero = (-softplus_pi
                     + pi_theta_log
                     + x * (jnp.log(mu + _EPS_ZINB) - log_theta_mu_eps)
                     + _lgamma(x + theta)
                     - _lgamma(theta)
                     - lgx1_ref[...])                    # lgamma(x+1) precomputed
    mul_case_non_zero = jnp.where(x > _EPS_ZINB, case_non_zero, 0.0)
    ll_st = mul_case_zero + mul_case_non_zero
    loss_st_ref[...] = -jnp.sum(ll_st, axis=1, keepdims=True)

    # ---------------- Gaussian reconstruction loss (SM), reduction='sum' ----------
    var_sm = jnp.exp(px_sm_rate)
    diff = x_sm - px_sm_scale
    # log(var_sm) == px_sm_rate exactly (no exp->log round trip)
    ll_sm = (-0.5 * (px_sm_rate + _LN_2PI)
             - 0.5 * diff * diff * pl.reciprocal(var_sm, approx=True))
    loss_sm_ref[...] = -jnp.sum(ll_sm, axis=1, keepdims=True)


# ------------------------------ parameter helpers ---------------------------------- #
def _round_up(x, m):
    return (x + m - 1) // m * m


def _linear_params(key, fan_in, fan_out):
    """PyTorch nn.Linear default init: U(-1/sqrt(fan_in), 1/sqrt(fan_in))."""
    kw, kb = jax.random.split(key)
    bound = 1.0 / math.sqrt(fan_in)
    w = jax.random.uniform(kw, (fan_in, fan_out), jnp.float32, -bound, bound)
    b = jax.random.uniform(kb, (1, fan_out), jnp.float32, -bound, bound)
    return w, b


def _fold_bn_eval(w, b, n_feat, eps=1e-5):
    """Fold eval-mode BatchNorm1d (gamma=1, beta=0, mean=0, var=1 at init) into Linear."""
    gamma = jnp.ones((n_feat,), jnp.float32)
    beta = jnp.zeros((n_feat,), jnp.float32)
    running_mean = jnp.zeros((n_feat,), jnp.float32)
    running_var = jnp.ones((n_feat,), jnp.float32)
    scale = gamma / jnp.sqrt(running_var + eps)
    return w * scale[None, :], (b - running_mean[None, :]) * scale[None, :] + beta[None, :]


def make_base_vae_params(key, in_dim_sm, in_dim_st, n_hidden, n_latent):
    keys = jax.random.split(key, 12)
    # encoder_SM / encoder_ST (SAE with stacks=[n_hidden], encode_only -> one FCLayer)
    w_esm, b_esm = _linear_params(keys[0], in_dim_sm, n_hidden)
    w_esm, b_esm = _fold_bn_eval(w_esm, b_esm, n_hidden)
    w_est, b_est = _linear_params(keys[1], in_dim_st, n_hidden)
    w_est, b_est = _fold_bn_eval(w_est, b_est, n_hidden)
    # z_mean_fc / z_var_fc take hstack((q_sm, q_st)) -> split weights
    w_mu, b_mu = _linear_params(keys[2], 2 * n_hidden, n_latent)
    w_var, b_var = _linear_params(keys[3], 2 * n_hidden, n_latent)
    # decoder FCLayer(n_latent -> n_hidden) with batch_norm
    w_dec, b_dec = _linear_params(keys[4], n_latent, n_hidden)
    w_dec, b_dec = _fold_bn_eval(w_dec, b_dec, n_hidden)
    # output heads
    w_rs, b_rs = _linear_params(keys[5], n_hidden, in_dim_st)
    w_rr, b_rr = _linear_params(keys[6], n_hidden, in_dim_st)
    w_rd, b_rd = _linear_params(keys[7], n_hidden, in_dim_st)
    w_ss, b_ss = _linear_params(keys[8], n_hidden, in_dim_sm)
    w_sr, b_sr = _linear_params(keys[9], n_hidden, in_dim_sm)
    w_sd, b_sd = _linear_params(keys[10], n_hidden, in_dim_sm)
    return dict(
        w_esm=w_esm, b_esm=b_esm, w_est=w_est, b_est=b_est,
        w_mu_sm=w_mu[:n_hidden], w_mu_st=w_mu[n_hidden:], b_mu=b_mu,
        w_var_sm=w_var[:n_hidden], w_var_st=w_var[n_hidden:], b_var=b_var,
        w_dec=w_dec, b_dec=b_dec,
        w_rs=w_rs, b_rs=b_rs, w_rr=w_rr, b_rr=b_rr, w_rd=w_rd, b_rd=b_rd,
        w_ss=w_ss, b_ss=b_ss, w_sr=w_sr, b_sr=b_sr, w_sd=w_sd, b_sd=b_sd,
    )


def _prepare_kernel_params(params):
    """Fuse mu/var and head weight matrices and cast matmul operands to bf16
    (f32 accumulation happens in-kernel); biases stay f32."""
    f32, bf16 = jnp.float32, jnp.bfloat16
    w_mv_sm = jnp.concatenate([params["w_mu_sm"], params["w_var_sm"]], axis=1)
    w_mv_st = jnp.concatenate([params["w_mu_st"], params["w_var_st"]], axis=1)
    b_mv = jnp.concatenate([params["b_mu"], params["b_var"]], axis=1)
    w_sth = jnp.concatenate([params["w_rs"], params["w_rr"], params["w_rd"]], axis=1)
    b_sth = jnp.concatenate([params["b_rs"], params["b_rr"], params["b_rd"]], axis=1)
    w_smh = jnp.concatenate([params["w_ss"], params["w_sr"], params["w_sd"]], axis=1)
    b_smh = jnp.concatenate([params["b_ss"], params["b_sr"], params["b_sd"]], axis=1)
    return dict(
        w_esm=params["w_esm"].astype(bf16), b_esm=params["b_esm"].astype(f32),
        w_est=params["w_est"].astype(bf16), b_est=params["b_est"].astype(f32),
        w_mv_sm=w_mv_sm.astype(bf16), w_mv_st=w_mv_st.astype(bf16),
        b_mv=b_mv.astype(f32),
        w_dec=params["w_dec"].astype(bf16), b_dec=params["b_dec"].astype(f32),
        w_sth=w_sth.astype(bf16), b_sth=b_sth.astype(f32),
        w_smh=w_smh.astype(bf16), b_smh=b_smh.astype(f32),
    )


# --------------------------------- wrapper ------------------------------------------ #
def base_vae_forward(X, type_mask_sm, params, noise, block_b=None):
    """Mirror BaseVAE.forward(X, reduction='sum'): returns (H, R, loss_record)."""
    f32 = jnp.float32
    mask = np.asarray(type_mask_sm, dtype=bool)
    sm_idx = np.where(mask)[0]
    st_idx = np.where(~mask)[0]
    # Prefer static contiguous slices over a fancy-index gather (avoids an HBM copy).
    if (sm_idx.size and st_idx.size
            and np.all(np.diff(sm_idx) == 1) and np.all(np.diff(st_idx) == 1)):
        x_sm = jax.lax.slice_in_dim(X, int(sm_idx[0]), int(sm_idx[-1]) + 1, axis=1)
        x_st = jax.lax.slice_in_dim(X, int(st_idx[0]), int(st_idx[-1]) + 1, axis=1)
    else:
        x_sm = jnp.take(X, jnp.asarray(sm_idx), axis=1)
        x_st = jnp.take(X, jnp.asarray(st_idx), axis=1)

    x_sm = x_sm.astype(f32)
    x_st = x_st.astype(f32)
    noise = noise.astype(f32)

    B = X.shape[0]
    d_sm = x_sm.shape[1]
    d_st = x_st.shape[1]
    n_latent = noise.shape[1]

    kp = _prepare_kernel_params(params)
    n_hidden = kp["w_esm"].shape[1]

    # log(x!) = lgamma(x+1) is constant w.r.t. parameters -> precompute outside kernel
    lgx1 = jax.lax.lgamma(x_st + 1.0)

    # ---- batch tile size: multiple of 8, bounded by a conservative VMEM budget ----
    weight_bytes = sum(int(np.prod(v.shape)) * v.dtype.itemsize for v in kp.values())
    per_row_bytes = 4 * (6 * d_sm + 16 * d_st + 8 * n_latent + 6 * n_hidden + 16)
    if block_b is None:
        budget = 40 * 1024 * 1024          # headroom for v7x's 64 MiB VMEM
        tb = min(256, _round_up(B, 8))
        while tb > 8 and weight_bytes + 2 * tb * per_row_bytes > budget:
            tb //= 2
        block_b = max(8, tb)
    TB = int(block_b)

    B_pad = _round_up(max(B, TB), TB)
    if B_pad != B:
        pad = [(0, B_pad - B), (0, 0)]
        x_sm = jnp.pad(x_sm, pad)
        x_st = jnp.pad(x_st, pad)
        lgx1 = jnp.pad(lgx1, pad)
        noise = jnp.pad(noise, pad)

    grid = (B_pad // TB,)

    def row_spec(d):
        return pl.BlockSpec((TB, d), lambda i: (i, 0))

    def w_spec(arr):
        return pl.BlockSpec(arr.shape, lambda i: (0, 0))

    inputs = [
        x_sm, x_st, lgx1, noise,
        kp["w_esm"], kp["b_esm"], kp["w_est"], kp["b_est"],
        kp["w_mv_sm"], kp["w_mv_st"], kp["b_mv"],
        kp["w_dec"], kp["b_dec"],
        kp["w_sth"], kp["b_sth"], kp["w_smh"], kp["b_smh"],
    ]
    in_specs = ([row_spec(d_sm), row_spec(d_st), row_spec(d_st), row_spec(n_latent)]
                + [w_spec(a) for a in inputs[4:]])

    out_shape = (
        jax.ShapeDtypeStruct((B_pad, 2 * n_hidden), f32),   # q = hstack(q_sm, q_st)
        jax.ShapeDtypeStruct((B_pad, n_latent), f32),       # q_mu
        jax.ShapeDtypeStruct((B_pad, n_latent), f32),       # q_var
        jax.ShapeDtypeStruct((B_pad, n_latent), f32),       # z
        jax.ShapeDtypeStruct((B_pad, n_hidden), f32),       # px
        jax.ShapeDtypeStruct((B_pad, 3 * d_st), f32),       # [rna_scale|rna_rate|rna_dropout]
        jax.ShapeDtypeStruct((B_pad, 3 * d_sm), f32),       # [sm_scale |sm_rate |sm_dropout]
        jax.ShapeDtypeStruct((B_pad, 1), f32),              # kldiv_loss
        jax.ShapeDtypeStruct((B_pad, 1), f32),              # reconstruction_loss_st
        jax.ShapeDtypeStruct((B_pad, 1), f32),              # reconstruction_loss_sm
    )
    out_specs = tuple(row_spec(s.shape[1]) for s in out_shape)

    in_bytes = sum(int(np.prod(a.shape)) * a.dtype.itemsize for a in inputs)
    out_bytes = sum(int(np.prod(s.shape)) * 4 for s in out_shape)
    cost = pl.CostEstimate(
        flops=int(2 * B_pad * n_hidden * (4 * d_sm + 4 * d_st + 5 * n_latent)),
        transcendentals=int(B_pad * (10 * d_st + 2 * d_sm + 3 * n_latent + n_hidden)),
        bytes_accessed=int(in_bytes + out_bytes),
    )

    vmem_limit = int(min(48 * 1024 * 1024,
                         max(16 * 1024 * 1024,
                             weight_bytes + 2 * TB * per_row_bytes + 4 * 1024 * 1024)))

    outs = pl.pallas_call(
        _base_vae_forward_kernel,
        grid=grid,
        in_specs=in_specs,
        out_specs=out_specs,
        out_shape=out_shape,
        compiler_params=pltpu.CompilerParams(
            dimension_semantics=("parallel",),
            vmem_limit_bytes=vmem_limit,
        ),
        cost_estimate=cost,
    )(*inputs)

    (q, q_mu, q_var, z, px, st_heads, sm_heads, kld, loss_st, loss_sm) = outs
    q, q_mu, q_var, z, px = q[:B], q_mu[:B], q_var[:B], z[:B], px[:B]
    st_heads, sm_heads = st_heads[:B], sm_heads[:B]

    H = dict(q=q, q_mu=q_mu, q_var=q_var, z=z)
    R = dict(h=None, px=px,
             px_rna_scale=st_heads[:, :d_st],
             px_rna_rate=st_heads[:, d_st:2 * d_st],
             px_rna_dropout=st_heads[:, 2 * d_st:],
             px_sm_scale=sm_heads[:, :d_sm],
             px_sm_rate=sm_heads[:, d_sm:2 * d_sm],
             px_sm_dropout=sm_heads[:, 2 * d_sm:])
    loss_record = dict(
        reconstruction_loss_sm=loss_sm[:B, 0],   # per-cell sum over SM features
        reconstruction_loss_st=loss_st[:B, 0],   # per-cell sum over ST genes
        kldiv_loss=kld[:B, 0],                   # per-cell sum over latent dims
    )
    return H, R, loss_record


# ----------------------------------- demo ------------------------------------------- #
if __name__ == "__main__":
    B = 8            # batch of cells
    D_SM = 16        # metabolite (SM) features
    D_ST = 32        # gene (ST) features (counts)
    N_HIDDEN = 32    # hidden_stacks=[32]
    N_LATENT = 16

    key = jax.random.PRNGKey(0)
    k_st, k_sm, k_noise, k_params = jax.random.split(key, 4)

    # adata.var.type: first D_SM columns 'SM', remaining D_ST columns 'ST'
    type_mask_sm = np.array([True] * D_SM + [False] * D_ST)

    x_st_counts = jax.random.poisson(k_st, 5.0, (B, D_ST)).astype(jnp.float32)
    x_sm_vals = jnp.abs(jax.random.normal(k_sm, (B, D_SM), jnp.float32)) + 0.1
    X = jnp.concatenate([x_sm_vals, x_st_counts], axis=1)        # (B, D_SM + D_ST)

    noise = jax.random.normal(k_noise, (B, N_LATENT), jnp.float32)  # rsample() noise
    params = make_base_vae_params(k_params, D_SM, D_ST, N_HIDDEN, N_LATENT)

    H, R, L = base_vae_forward(X, type_mask_sm, params, noise)
    jax.block_until_ready((H, R, L))

    assert H["q"].shape == (B, 2 * N_HIDDEN)
    assert H["z"].shape == (B, N_LATENT)
    assert R["px"].shape == (B, N_HIDDEN)
    assert R["px_rna_scale"].shape == (B, D_ST)
    assert R["px_sm_scale"].shape == (B, D_SM)
    assert L["kldiv_loss"].shape == (B,)
    assert np.all(np.isfinite(np.asarray(H["z"])))
    assert np.all(np.isfinite(np.asarray(L["kldiv_loss"])))
    assert np.all(np.isfinite(np.asarray(L["reconstruction_loss_st"])))
    assert np.all(np.isfinite(np.asarray(L["reconstruction_loss_sm"])))
    print("KERNEL_OK")
</pallas_src>

<mosaic_0001>
module attributes {stable_mosaic.version = 11 : i64} {
  func.func @_base_vae_forward_kernel(%arg0: i32, %arg1: memref<8x16xf32, #tpu.memory_space<vmem>>, %arg2: memref<8x32xf32, #tpu.memory_space<vmem>>, %arg3: memref<8x32xf32, #tpu.memory_space<vmem>>, %arg4: memref<8x16xf32, #tpu.memory_space<vmem>>, %arg5: memref<16x32xbf16, #tpu.memory_space<vmem>>, %arg6: memref<1x32xf32, #tpu.memory_space<vmem>>, %arg7: memref<32x32xbf16, #tpu.memory_space<vmem>>, %arg8: memref<1x32xf32, #tpu.memory_space<vmem>>, %arg9: memref<32x32xbf16, #tpu.memory_space<vmem>>, %arg10: memref<32x32xbf16, #tpu.memory_space<vmem>>, %arg11: memref<1x32xf32, #tpu.memory_space<vmem>>, %arg12: memref<16x32xbf16, #tpu.memory_space<vmem>>, %arg13: memref<1x32xf32, #tpu.memory_space<vmem>>, %arg14: memref<32x96xbf16, #tpu.memory_space<vmem>>, %arg15: memref<1x96xf32, #tpu.memory_space<vmem>>, %arg16: memref<32x48xbf16, #tpu.memory_space<vmem>>, %arg17: memref<1x48xf32, #tpu.memory_space<vmem>>, %arg18: memref<8x64xf32, #tpu.memory_space<vmem>>, %arg19: memref<8x16xf32, #tpu.memory_space<vmem>>, %arg20: memref<8x16xf32, #tpu.memory_space<vmem>>, %arg21: memref<8x16xf32, #tpu.memory_space<vmem>>, %arg22: memref<8x32xf32, #tpu.memory_space<vmem>>, %arg23: memref<8x96xf32, #tpu.memory_space<vmem>>, %arg24: memref<8x48xf32, #tpu.memory_space<vmem>>, %arg25: memref<8x1xf32, #tpu.memory_space<vmem>>, %arg26: memref<8x1xf32, #tpu.memory_space<vmem>>, %arg27: memref<8x1xf32, #tpu.memory_space<vmem>>) attributes {dimension_semantics = [#tpu.dimension_semantics<parallel>], iteration_bounds = array<i64: 1>, scalar_prefetch = 0 : i64, scratch_operands = 0 : i64, tpu.core_type = #tpu.core_type<tc>, window_params = [{transform_indices = @transform_0, window_bounds = array<i64: 8, 16>}, {transform_indices = @transform_1, window_bounds = array<i64: 8, 32>}, {transform_indices = @transform_2, window_bounds = array<i64: 8, 32>}, {transform_indices = @transform_3, window_bounds = array<i64: 8, 16>}, {pipeline_mode = #tpu.pipeline_mode<synchronous>, transform_indices = @transform_4, window_bounds = array<i64: 16, 32>}, {pipeline_mode = #tpu.pipeline_mode<synchronous>, transform_indices = @transform_5, window_bounds = array<i64: 1, 32>}, {pipeline_mode = #tpu.pipeline_mode<synchronous>, transform_indices = @transform_6, window_bounds = array<i64: 32, 32>}, {pipeline_mode = #tpu.pipeline_mode<synchronous>, transform_indices = @transform_7, window_bounds = array<i64: 1, 32>}, {pipeline_mode = #tpu.pipeline_mode<synchronous>, transform_indices = @transform_8, window_bounds = array<i64: 32, 32>}, {pipeline_mode = #tpu.pipeline_mode<synchronous>, transform_indices = @transform_9, window_bounds = array<i64: 32, 32>}, {pipeline_mode = #tpu.pipeline_mode<synchronous>, transform_indices = @transform_10, window_bounds = array<i64: 1, 32>}, {pipeline_mode = #tpu.pipeline_mode<synchronous>, transform_indices = @transform_11, window_bounds = array<i64: 16, 32>}, {pipeline_mode = #tpu.pipeline_mode<synchronous>, transform_indices = @transform_12, window_bounds = array<i64: 1, 32>}, {pipeline_mode = #tpu.pipeline_mode<synchronous>, transform_indices = @transform_13, window_bounds = array<i64: 32, 96>}, {pipeline_mode = #tpu.pipeline_mode<synchronous>, transform_indices = @transform_14, window_bounds = array<i64: 1, 96>}, {pipeline_mode = #tpu.pipeline_mode<synchronous>, transform_indices = @transform_15, window_bounds = array<i64: 32, 48>}, {pipeline_mode = #tpu.pipeline_mode<synchronous>, transform_indices = @transform_16, window_bounds = array<i64: 1, 48>}, {transform_indices = @transform_17, window_bounds = array<i64: 8, 64>}, {transform_indices = @transform_18, window_bounds = array<i64: 8, 16>}, {transform_indices = @transform_19, window_bounds = array<i64: 8, 16>}, {transform_indices = @transform_20, window_bounds = array<i64: 8, 16>}, {transform_indices = @transform_21, window_bounds = array<i64: 8, 32>}, {transform_indices = @transform_22, window_bounds = array<i64: 8, 96>}, {transform_indices = @transform_23, window_bounds = array<i64: 8, 48>}, {transform_indices = @transform_24, window_bounds = array<i64: 8, 1>}, {transform_indices = @transform_25, window_bounds = array<i64: 8, 1>}, {transform_indices = @transform_26, window_bounds = array<i64: 8, 1>}]} {
    %c0 = arith.constant 0 : index
    %c0_0 = arith.constant 0 : index
    %0 = vector.load %arg1[%c0, %c0_0] : memref<8x16xf32, #tpu.memory_space<vmem>>, vector<8x16xf32>
    %c0_1 = arith.constant 0 : index
    %c0_2 = arith.constant 0 : index
    %1 = vector.load %arg2[%c0_1, %c0_2] : memref<8x32xf32, #tpu.memory_space<vmem>>, vector<8x32xf32>
    %cst = arith.constant 1.000000e+00 : f32
    %2 = vector.broadcast %cst : f32 to vector<8x32xf32>
    %3 = arith.addf %1, %2 : vector<8x32xf32>
    %4 = math.log %3 : vector<8x32xf32>
    %5 = arith.truncf %0 : vector<8x16xf32> to vector<8x16xbf16>
    %c0_3 = arith.constant 0 : index
    %c0_4 = arith.constant 0 : index
    %6 = vector.load %arg5[%c0_3, %c0_4] : memref<16x32xbf16, #tpu.memory_space<vmem>>, vector<16x32xbf16>
    %cst_5 = arith.constant dense<0.000000e+00> : vector<8x32xf32>
    %7 = tpu.matmul %5, %6, %cst_5 {dimension_numbers = #tpu.dot_dimension_numbers<[1], [0], [0], [1], [0, 0, 1, 1], [], []>} : vector<8x16xbf16>, vector<16x32xbf16>, vector<8x32xf32> -> vector<8x32xf32>
    %c0_6 = arith.constant 0 : index
    %c0_7 = arith.constant 0 : index
    %8 = vector.load %arg6[%c0_6, %c0_7] : memref<1x32xf32, #tpu.memory_space<vmem>>, vector<1x32xf32>
    %9 = vector.broadcast %8 : vector<1x32xf32> to vector<8x32xf32>
    %10 = arith.addf %7, %9 : vector<8x32xf32>
    %cst_8 = arith.constant 0.000000e+00 : f32
    %11 = vector.broadcast %cst_8 : f32 to vector<8x32xf32>
    %12 = arith.maximumf %10, %11 : vector<8x32xf32>
    %13 = arith.truncf %4 : vector<8x32xf32> to vector<8x32xbf16>
    %c0_9 = arith.constant 0 : index
    %c0_10 = arith.constant 0 : index
    %14 = vector.load %arg7[%c0_9, %c0_10] : memref<32x32xbf16, #tpu.memory_space<vmem>>, vector<32x32xbf16>
    %cst_11 = arith.constant dense<0.000000e+00> : vector<8x32xf32>
    %15 = tpu.matmul %13, %14, %cst_11 {dimension_numbers = #tpu.dot_dimension_numbers<[1], [0], [0], [1], [0, 0, 1, 1], [], []>} : vector<8x32xbf16>, vector<32x32xbf16>, vector<8x32xf32> -> vector<8x32xf32>
    %c0_12 = arith.constant 0 : index
    %c0_13 = arith.constant 0 : index
    %16 = vector.load %arg8[%c0_12, %c0_13] : memref<1x32xf32, #tpu.memory_space<vmem>>, vector<1x32xf32>
    %17 = vector.broadcast %16 : vector<1x32xf32> to vector<8x32xf32>
    %18 = arith.addf %15, %17 : vector<8x32xf32>
    %cst_14 = arith.constant 0.000000e+00 : f32
    %19 = vector.broadcast %cst_14 : f32 to vector<8x32xf32>
    %20 = arith.maximumf %18, %19 : vector<8x32xf32>
    %21 = tpu.concatenate %12, %20 in 1 : vector<8x32xf32>, vector<8x32xf32> -> vector<8x64xf32>
    %c0_15 = arith.constant 0 : index
    %c0_16 = arith.constant 0 : index
    %22 = vector.load %arg18[%c0_15, %c0_16] : memref<8x64xf32, #tpu.memory_space<vmem>>, vector<8x64xf32>
    tpu.vector_store %arg18[%c0_15, %c0_16], %21 {strides = array<i32>} : memref<8x64xf32, #tpu.memory_space<vmem>>, vector<8x64xf32>,
    %23 = arith.truncf %12 : vector<8x32xf32> to vector<8x32xbf16>
    %c0_17 = arith.constant 0 : index
    %c0_18 = arith.constant 0 : index
    %24 = vector.load %arg9[%c0_17, %c0_18] : memref<32x32xbf16, #tpu.memory_space<vmem>>, vector<32x32xbf16>
    %cst_19 = arith.constant dense<0.000000e+00> : vector<8x32xf32>
    %25 = tpu.matmul %23, %24, %cst_19 {dimension_numbers = #tpu.dot_dimension_numbers<[1], [0], [0], [1], [0, 0, 1, 1], [], []>} : vector<8x32xbf16>, vector<32x32xbf16>, vector<8x32xf32> -> vector<8x32xf32>
    %26 = arith.truncf %20 : vector<8x32xf32> to vector<8x32xbf16>
    %c0_20 = arith.constant 0 : index
    %c0_21 = arith.constant 0 : index
    %27 = vector.load %arg10[%c0_20, %c0_21] : memref<32x32xbf16, #tpu.memory_space<vmem>>, vector<32x32xbf16>
    %cst_22 = arith.constant dense<0.000000e+00> : vector<8x32xf32>
    %28 = tpu.matmul %26, %27, %cst_22 {dimension_numbers = #tpu.dot_dimension_numbers<[1], [0], [0], [1], [0, 0, 1, 1], [], []>} : vector<8x32xbf16>, vector<32x32xbf16>, vector<8x32xf32> -> vector<8x32xf32>
    %29 = arith.addf %25, %28 : vector<8x32xf32>
    %c0_23 = arith.constant 0 : index
    %c0_24 = arith.constant 0 : index
    %30 = vector.load %arg11[%c0_23, %c0_24] : memref<1x32xf32, #tpu.memory_space<vmem>>, vector<1x32xf32>
    %31 = vector.broadcast %30 : vector<1x32xf32> to vector<8x32xf32>
    %32 = arith.addf %29, %31 : vector<8x32xf32>
    %33 = vector.extract_strided_slice %32 {offsets = [0, 0], sizes = [8, 16], strides = [1, 1]} : vector<8x32xf32> to vector<8x16xf32>
    %34 = vector.extract_strided_slice %32 {offsets = [0, 16], sizes = [8, 16], strides = [1, 1]} : vector<8x32xf32> to vector<8x16xf32>
    %35 = math.exp %34 : vector<8x16xf32>
    %cst_25 = arith.constant 9.99999974E-5 : f32
    %36 = vector.broadcast %cst_25 : f32 to vector<8x16xf32>
    %37 = arith.addf %35, %36 : vector<8x16xf32>
    %38 = math.sqrt %37 : vector<8x16xf32>
    %c0_26 = arith.constant 0 : index
    %c0_27 = arith.constant 0 : index
    %39 = vector.load %arg4[%c0_26, %c0_27] : memref<8x16xf32, #tpu.memory_space<vmem>>, vector<8x16xf32>
    %40 = arith.mulf %38, %39 : vector<8x16xf32>
    %41 = arith.addf %33, %40 : vector<8x16xf32>
    %c0_28 = arith.constant 0 : index
    %c0_29 = arith.constant 0 : index
    %42 = vector.load %arg19[%c0_28, %c0_29] : memref<8x16xf32, #tpu.memory_space<vmem>>, vector<8x16xf32>
    tpu.vector_store %arg19[%c0_28, %c0_29], %33 {strides = array<i32>} : memref<8x16xf32, #tpu.memory_space<vmem>>, vector<8x16xf32>,
    %c0_30 = arith.constant 0 : index
    %c0_31 = arith.constant 0 : index
    %43 = vector.load %arg20[%c0_30, %c0_31] : memref<8x16xf32, #tpu.memory_space<vmem>>, vector<8x16xf32>
    tpu.vector_store %arg20[%c0_30, %c0_31], %37 {strides = array<i32>} : memref<8x16xf32, #tpu.memory_space<vmem>>, vector<8x16xf32>,
    %c0_32 = arith.constant 0 : index
    %c0_33 = arith.constant 0 : index
    %44 = vector.load %arg21[%c0_32, %c0_33] : memref<8x16xf32, #tpu.memory_space<vmem>>, vector<8x16xf32>
    tpu.vector_store %arg21[%c0_32, %c0_33], %41 {strides = array<i32>} : memref<8x16xf32, #tpu.memory_space<vmem>>, vector<8x16xf32>,
    %45 = arith.mulf %33, %33 : vector<8x16xf32>
    %46 = arith.addf %37, %45 : vector<8x16xf32>
    %cst_34 = arith.constant 1.000000e+00 : f32
    %47 = vector.broadcast %cst_34 : f32 to vector<8x16xf32>
    %48 = arith.subf %46, %47 : vector<8x16xf32>
    %cst_35 = arith.constant 5.000000e-01 : f32
    %49 = vector.broadcast %cst_35 : f32 to vector<8x16xf32>
    %50 = arith.mulf %49, %48 : vector<8x16xf32>
    %51 = math.log %37 : vector<8x16xf32>
    %cst_36 = arith.constant 5.000000e-01 : f32
    %52 = vector.broadcast %cst_36 : f32 to vector<8x16xf32>
    %53 = arith.mulf %52, %51 : vector<8x16xf32>
    %54 = arith.subf %50, %53 : vector<8x16xf32>
    %cst_37 = arith.constant dense<0.000000e+00> : vector<8xf32>
    %55 = vector.multi_reduction <add>, %54, %cst_37 [1] : vector<8x16xf32> to vector<8xf32>
    %56 = vector.shape_cast %55 : vector<8xf32> to vector<8x1xf32>
    %c0_38 = arith.constant 0 : index
    %c0_39 = arith.constant 0 : index
    %57 = vector.load %arg25[%c0_38, %c0_39] : memref<8x1xf32, #tpu.memory_space<vmem>>, vector<8x1xf32>
    tpu.vector_store %arg25[%c0_38, %c0_39], %56 {strides = array<i32>} : memref<8x1xf32, #tpu.memory_space<vmem>>, vector<8x1xf32>,
    %58 = arith.truncf %41 : vector<8x16xf32> to vector<8x16xbf16>
    %c0_40 = arith.constant 0 : index
    %c0_41 = arith.constant 0 : index
    %59 = vector.load %arg12[%c0_40, %c0_41] : memref<16x32xbf16, #tpu.memory_space<vmem>>, vector<16x32xbf16>
    %cst_42 = arith.constant dense<0.000000e+00> : vector<8x32xf32>
    %60 = tpu.matmul %58, %59, %cst_42 {dimension_numbers = #tpu.dot_dimension_numbers<[1], [0], [0], [1], [0, 0, 1, 1], [], []>} : vector<8x16xbf16>, vector<16x32xbf16>, vector<8x32xf32> -> vector<8x32xf32>
    %c0_43 = arith.constant 0 : index
    %c0_44 = arith.constant 0 : index
    %61 = vector.load %arg13[%c0_43, %c0_44] : memref<1x32xf32, #tpu.memory_space<vmem>>, vector<1x32xf32>
    %62 = vector.broadcast %61 : vector<1x32xf32> to vector<8x32xf32>
    %63 = arith.addf %60, %62 : vector<8x32xf32>
    %cst_45 = arith.constant 0.000000e+00 : f32
    %64 = vector.broadcast %cst_45 : f32 to vector<8x32xf32>
    %65 = arith.maximumf %63, %64 : vector<8x32xf32>
    %c0_46 = arith.constant 0 : index
    %c0_47 = arith.constant 0 : index
    %66 = vector.load %arg22[%c0_46, %c0_47] : memref<8x32xf32, #tpu.memory_space<vmem>>, vector<8x32xf32>
    tpu.vector_store %arg22[%c0_46, %c0_47], %65 {strides = array<i32>} : memref<8x32xf32, #tpu.memory_space<vmem>>, vector<8x32xf32>,
    %cst_48 = arith.constant dense<0.000000e+00> : vector<8xf32>
    %67 = vector.multi_reduction <add>, %1, %cst_48 [1] : vector<8x32xf32> to vector<8xf32>
    %68 = vector.shape_cast %67 : vector<8xf32> to vector<8x1xf32>
    %69 = arith.truncf %65 : vector<8x32xf32> to vector<8x32xbf16>
    %c0_49 = arith.constant 0 : index
    %c0_50 = arith.constant 0 : index
    %70 = vector.load %arg14[%c0_49, %c0_50] : memref<32x96xbf16, #tpu.memory_space<vmem>>, vector<32x96xbf16>
    %cst_51 = arith.constant dense<0.000000e+00> : vector<8x96xf32>
    %71 = tpu.matmul %69, %70, %cst_51 {dimension_numbers = #tpu.dot_dimension_numbers<[1], [0], [0], [1], [0, 0, 1, 1], [], []>} : vector<8x32xbf16>, vector<32x96xbf16>, vector<8x96xf32> -> vector<8x96xf32>
    %c0_52 = arith.constant 0 : index
    %c0_53 = arith.constant 0 : index
    %72 = vector.load %arg15[%c0_52, %c0_53] : memref<1x96xf32, #tpu.memory_space<vmem>>, vector<1x96xf32>
    %73 = vector.broadcast %72 : vector<1x96xf32> to vector<8x96xf32>
    %74 = arith.addf %71, %73 : vector<8x96xf32>
    %c0_54 = arith.constant 0 : index
    %c0_55 = arith.constant 0 : index
    %75 = vector.load %arg16[%c0_54, %c0_55] : memref<32x48xbf16, #tpu.memory_space<vmem>>, vector<32x48xbf16>
    %cst_56 = arith.constant dense<0.000000e+00> : vector<8x48xf32>
    %76 = tpu.matmul %69, %75, %cst_56 {dimension_numbers = #tpu.dot_dimension_numbers<[1], [0], [0], [1], [0, 0, 1, 1], [], []>} : vector<8x32xbf16>, vector<32x48xbf16>, vector<8x48xf32> -> vector<8x48xf32>
    %c0_57 = arith.constant 0 : index
    %c0_58 = arith.constant 0 : index
    %77 = vector.load %arg17[%c0_57, %c0_58] : memref<1x48xf32, #tpu.memory_space<vmem>>, vector<1x48xf32>
    %78 = vector.broadcast %77 : vector<1x48xf32> to vector<8x48xf32>
    %79 = arith.addf %76, %78 : vector<8x48xf32>
    %80 = vector.extract_strided_slice %74 {offsets = [0, 0], sizes = [8, 32], strides = [1, 1]} : vector<8x96xf32> to vector<8x32xf32>
    %81 = vector.extract_strided_slice %74 {offsets = [0, 32], sizes = [8, 32], strides = [1, 1]} : vector<8x96xf32> to vector<8x32xf32>
    %82 = vector.extract_strided_slice %74 {offsets = [0, 64], sizes = [8, 32], strides = [1, 1]} : vector<8x96xf32> to vector<8x32xf32>
    %cst_59 = arith.constant dense<0xFF800000> : vector<8xf32>
    %83 = vector.multi_reduction <maximumf>, %80, %cst_59 [1] : vector<8x32xf32> to vector<8xf32>
    %84 = vector.shape_cast %83 : vector<8xf32> to vector<8x1xf32>
    %85 = vector.broadcast %84 : vector<8x1xf32> to vector<8x32xf32>
    %86 = arith.subf %80, %85 : vector<8x32xf32>
    %87 = math.exp %86 : vector<8x32xf32>
    %cst_60 = arith.constant dense<0.000000e+00> : vector<8xf32>
    %88 = vector.multi_reduction <add>, %87, %cst_60 [1] : vector<8x32xf32> to vector<8xf32>
    %89 = vector.shape_cast %88 : vector<8xf32> to vector<8x1xf32>
    %90 = tpu.reciprocal %89 {approx = true} : vector<8x1xf32> -> vector<8x1xf32>
    %91 = vector.broadcast %90 : vector<8x1xf32> to vector<8x32xf32>
    %92 = arith.mulf %87, %91 : vector<8x32xf32>
    %93 = vector.broadcast %68 : vector<8x1xf32> to vector<8x32xf32>
    %94 = arith.mulf %92, %93 : vector<8x32xf32>
    %95 = vector.extract_strided_slice %74 {offsets = [0, 32], sizes = [8, 64], strides = [1, 1]} : vector<8x96xf32> to vector<8x64xf32>
    %96 = tpu.concatenate %94, %95 in 1 : vector<8x32xf32>, vector<8x64xf32> -> vector<8x96xf32>
    %c0_61 = arith.constant 0 : index
    %c0_62 = arith.constant 0 : index
    %97 = vector.load %arg23[%c0_61, %c0_62] : memref<8x96xf32, #tpu.memory_space<vmem>>, vector<8x96xf32>
    tpu.vector_store %arg23[%c0_61, %c0_62], %96 {strides = array<i32>} : memref<8x96xf32, #tpu.memory_space<vmem>>, vector<8x96xf32>,
    %c0_63 = arith.constant 0 : index
    %c0_64 = arith.constant 0 : index
    %98 = vector.load %arg24[%c0_63, %c0_64] : memref<8x48xf32, #tpu.memory_space<vmem>>, vector<8x48xf32>
    tpu.vector_store %arg24[%c0_63, %c0_64], %79 {strides = array<i32>} : memref<8x48xf32, #tpu.memory_space<vmem>>, vector<8x48xf32>,
    %99 = vector.extract_strided_slice %79 {offsets = [0, 0], sizes = [8, 16], strides = [1, 1]} : vector<8x48xf32> to vector<8x16xf32>
    %100 = vector.extract_strided_slice %79 {offsets = [0, 16], sizes = [8, 16], strides = [1, 1]} : vector<8x48xf32> to vector<8x16xf32>
    %101 = math.exp %81 : vector<8x32xf32>
    %cst_65 = arith.constant 0.000000e+00 : f32
    %102 = vector.broadcast %cst_65 : f32 to vector<8x32xf32>
    %103 = arith.subf %102, %82 : vector<8x32xf32>
    %cst_66 = arith.constant 0.000000e+00 : f32
    %104 = vector.broadcast %cst_66 : f32 to vector<8x32xf32>
    %105 = arith.maximumf %103, %104 : vector<8x32xf32>
    %106 = math.absf %103 : vector<8x32xf32>
    %cst_67 = arith.constant 0.000000e+00 : f32
    %107 = vector.broadcast %cst_67 : f32 to vector<8x32xf32>
    %108 = arith.subf %107, %106 : vector<8x32xf32>
    %109 = math.exp %108 : vector<8x32xf32>
    %cst_68 = arith.constant 1.000000e+00 : f32
    %110 = vector.broadcast %cst_68 : f32 to vector<8x32xf32>
    %111 = arith.addf %110, %109 : vector<8x32xf32>
    %112 = math.log %111 : vector<8x32xf32>
    %113 = arith.addf %105, %112 : vector<8x32xf32>
    %cst_69 = arith.constant 9.99999993E-9 : f32
    %114 = vector.broadcast %cst_69 : f32 to vector<8x32xf32>
    %115 = arith.addf %101, %114 : vector<8x32xf32>
    %116 = math.log %115 : vector<8x32xf32>
    %117 = arith.addf %101, %94 : vector<8x32xf32>
    %cst_70 = arith.constant 9.99999993E-9 : f32
    %118 = vector.broadcast %cst_70 : f32 to vector<8x32xf32>
    %119 = arith.addf %117, %118 : vector<8x32xf32>
    %120 = math.log %119 : vector<8x32xf32>
    %cst_71 = arith.constant 0.000000e+00 : f32
    %121 = vector.broadcast %cst_71 : f32 to vector<8x32xf32>
    %122 = arith.subf %121, %82 : vector<8x32xf32>
    %123 = arith.subf %116, %120 : vector<8x32xf32>
    %124 = arith.mulf %101, %123 : vector<8x32xf32>
    %125 = arith.addf %122, %124 : vector<8x32xf32>
    %cst_72 = arith.constant 0.000000e+00 : f32
    %126 = vector.broadcast %cst_72 : f32 to vector<8x32xf32>
    %127 = arith.maximumf %125, %126 : vector<8x32xf32>
    %128 = math.absf %125 : vector<8x32xf32>
    %cst_73 = arith.constant 0.000000e+00 : f32
    %129 = vector.broadcast %cst_73 : f32 to vector<8x32xf32>
    %130 = arith.subf %129, %128 : vector<8x32xf32>
    %131 = math.exp %130 : vector<8x32xf32>
    %cst_74 = arith.constant 1.000000e+00 : f32
    %132 = vector.broadcast %cst_74 : f32 to vector<8x32xf32>
    %133 = arith.addf %132, %131 : vector<8x32xf32>
    %134 = math.log %133 : vector<8x32xf32>
    %135 = arith.addf %127, %134 : vector<8x32xf32>
    %136 = arith.subf %135, %113 : vector<8x32xf32>
    %cst_75 = arith.constant 9.99999993E-9 : f32
    %137 = vector.broadcast %cst_75 : f32 to vector<8x32xf32>
    %138 = arith.cmpf olt, %1, %137 : vector<8x32xf32>
    %cst_76 = arith.constant 0.000000e+00 : f32
    %139 = vector.broadcast %cst_76 : f32 to vector<8x32xf32>
    %140 = arith.select %138, %136, %139 : vector<8x32xi1>, vector<8x32xf32>
    %cst_77 = arith.constant 0.000000e+00 : f32
    %141 = vector.broadcast %cst_77 : f32 to vector<8x32xf32>
    %142 = arith.subf %141, %113 : vector<8x32xf32>
    %143 = arith.addf %142, %125 : vector<8x32xf32>
    %cst_78 = arith.constant 9.99999993E-9 : f32
    %144 = vector.broadcast %cst_78 : f32 to vector<8x32xf32>
    %145 = arith.addf %94, %144 : vector<8x32xf32>
    %146 = math.log %145 : vector<8x32xf32>
    %147 = arith.subf %146, %120 : vector<8x32xf32>
    %148 = arith.mulf %1, %147 : vector<8x32xf32>
    %149 = arith.addf %143, %148 : vector<8x32xf32>
    %150 = arith.addf %1, %101 : vector<8x32xf32>
    %cst_79 = arith.constant 1.000000e+00 : f32
    %151 = vector.broadcast %cst_79 : f32 to vector<8x32xf32>
    %152 = arith.addf %150, %151 : vector<8x32xf32>
    %153 = arith.mulf %150, %152 : vector<8x32xf32>
    %cst_80 = arith.constant 2.000000e+00 : f32
    %154 = vector.broadcast %cst_80 : f32 to vector<8x32xf32>
    %155 = arith.addf %150, %154 : vector<8x32xf32>
    %156 = arith.mulf %153, %155 : vector<8x32xf32>
    %cst_81 = arith.constant 3.000000e+00 : f32
    %157 = vector.broadcast %cst_81 : f32 to vector<8x32xf32>
    %158 = arith.addf %150, %157 : vector<8x32xf32>
    %159 = arith.mulf %156, %158 : vector<8x32xf32>
    %cst_82 = arith.constant 4.000000e+00 : f32
    %160 = vector.broadcast %cst_82 : f32 to vector<8x32xf32>
    %161 = arith.addf %150, %160 : vector<8x32xf32>
    %cst_83 = arith.constant 5.000000e+00 : f32
    %162 = vector.broadcast %cst_83 : f32 to vector<8x32xf32>
    %163 = arith.addf %150, %162 : vector<8x32xf32>
    %164 = arith.mulf %161, %163 : vector<8x32xf32>
    %cst_84 = arith.constant 6.000000e+00 : f32
    %165 = vector.broadcast %cst_84 : f32 to vector<8x32xf32>
    %166 = arith.addf %150, %165 : vector<8x32xf32>
    %167 = arith.mulf %164, %166 : vector<8x32xf32>
    %cst_85 = arith.constant 7.000000e+00 : f32
    %168 = vector.broadcast %cst_85 : f32 to vector<8x32xf32>
    %169 = arith.addf %150, %168 : vector<8x32xf32>
    %170 = arith.mulf %167, %169 : vector<8x32xf32>
    %171 = math.log %159 : vector<8x32xf32>
    %172 = math.log %170 : vector<8x32xf32>
    %173 = arith.addf %171, %172 : vector<8x32xf32>
    %cst_86 = arith.constant 8.000000e+00 : f32
    %174 = vector.broadcast %cst_86 : f32 to vector<8x32xf32>
    %175 = arith.addf %150, %174 : vector<8x32xf32>
    %176 = tpu.reciprocal %175 {approx = true} : vector<8x32xf32> -> vector<8x32xf32>
    %177 = arith.mulf %176, %176 : vector<8x32xf32>
    %cst_87 = arith.constant 7.93650805E-4 : f32
    %178 = vector.broadcast %cst_87 : f32 to vector<8x32xf32>
    %179 = arith.mulf %177, %178 : vector<8x32xf32>
    %cst_88 = arith.constant 0.00277777785 : f32
    %180 = vector.broadcast %cst_88 : f32 to vector<8x32xf32>
    %181 = arith.subf %180, %179 : vector<8x32xf32>
    %182 = arith.mulf %177, %181 : vector<8x32xf32>
    %cst_89 = arith.constant 0.0833333358 : f32
    %183 = vector.broadcast %cst_89 : f32 to vector<8x32xf32>
    %184 = arith.subf %183, %182 : vector<8x32xf32>
    %185 = arith.mulf %176, %184 : vector<8x32xf32>
    %cst_90 = arith.constant 5.000000e-01 : f32
    %186 = vector.broadcast %cst_90 : f32 to vector<8x32xf32>
    %187 = arith.subf %175, %186 : vector<8x32xf32>
    %188 = math.log %175 : vector<8x32xf32>
    %189 = arith.mulf %187, %188 : vector<8x32xf32>
    %190 = arith.subf %189, %175 : vector<8x32xf32>
    %cst_91 = arith.constant 0.918938517 : f32
    %191 = vector.broadcast %cst_91 : f32 to vector<8x32xf32>
    %192 = arith.addf %190, %191 : vector<8x32xf32>
    %193 = arith.addf %192, %185 : vector<8x32xf32>
    %194 = arith.subf %193, %173 : vector<8x32xf32>
    %195 = arith.addf %149, %194 : vector<8x32xf32>
    %cst_92 = arith.constant 1.000000e+00 : f32
    %196 = vector.broadcast %cst_92 : f32 to vector<8x32xf32>
    %197 = arith.addf %101, %196 : vector<8x32xf32>
    %198 = arith.mulf %101, %197 : vector<8x32xf32>
    %cst_93 = arith.constant 2.000000e+00 : f32
    %199 = vector.broadcast %cst_93 : f32 to vector<8x32xf32>
    %200 = arith.addf %101, %199 : vector<8x32xf32>
    %201 = arith.mulf %198, %200 : vector<8x32xf32>
    %cst_94 = arith.constant 3.000000e+00 : f32
    %202 = vector.broadcast %cst_94 : f32 to vector<8x32xf32>
    %203 = arith.addf %101, %202 : vector<8x32xf32>
    %204 = arith.mulf %201, %203 : vector<8x32xf32>
    %cst_95 = arith.constant 4.000000e+00 : f32
    %205 = vector.broadcast %cst_95 : f32 to vector<8x32xf32>
    %206 = arith.addf %101, %205 : vector<8x32xf32>
    %cst_96 = arith.constant 5.000000e+00 : f32
    %207 = vector.broadcast %cst_96 : f32 to vector<8x32xf32>
    %208 = arith.addf %101, %207 : vector<8x32xf32>
    %209 = arith.mulf %206, %208 : vector<8x32xf32>
    %cst_97 = arith.constant 6.000000e+00 : f32
    %210 = vector.broadcast %cst_97 : f32 to vector<8x32xf32>
    %211 = arith.addf %101, %210 : vector<8x32xf32>
    %212 = arith.mulf %209, %211 : vector<8x32xf32>
    %cst_98 = arith.constant 7.000000e+00 : f32
    %213 = vector.broadcast %cst_98 : f32 to vector<8x32xf32>
    %214 = arith.addf %101, %213 : vector<8x32xf32>
    %215 = arith.mulf %212, %214 : vector<8x32xf32>
    %216 = math.log %204 : vector<8x32xf32>
    %217 = math.log %215 : vector<8x32xf32>
    %218 = arith.addf %216, %217 : vector<8x32xf32>
    %cst_99 = arith.constant 8.000000e+00 : f32
    %219 = vector.broadcast %cst_99 : f32 to vector<8x32xf32>
    %220 = arith.addf %101, %219 : vector<8x32xf32>
    %221 = tpu.reciprocal %220 {approx = true} : vector<8x32xf32> -> vector<8x32xf32>
    %222 = arith.mulf %221, %221 : vector<8x32xf32>
    %cst_100 = arith.constant 7.93650805E-4 : f32
    %223 = vector.broadcast %cst_100 : f32 to vector<8x32xf32>
    %224 = arith.mulf %222, %223 : vector<8x32xf32>
    %cst_101 = arith.constant 0.00277777785 : f32
    %225 = vector.broadcast %cst_101 : f32 to vector<8x32xf32>
    %226 = arith.subf %225, %224 : vector<8x32xf32>
    %227 = arith.mulf %222, %226 : vector<8x32xf32>
    %cst_102 = arith.constant 0.0833333358 : f32
    %228 = vector.broadcast %cst_102 : f32 to vector<8x32xf32>
    %229 = arith.subf %228, %227 : vector<8x32xf32>
    %230 = arith.mulf %221, %229 : vector<8x32xf32>
    %cst_103 = arith.constant 5.000000e-01 : f32
    %231 = vector.broadcast %cst_103 : f32 to vector<8x32xf32>
    %232 = arith.subf %220, %231 : vector<8x32xf32>
    %233 = math.log %220 : vector<8x32xf32>
    %234 = arith.mulf %232, %233 : vector<8x32xf32>
    %235 = arith.subf %234, %220 : vector<8x32xf32>
    %cst_104 = arith.constant 0.918938517 : f32
    %236 = vector.broadcast %cst_104 : f32 to vector<8x32xf32>
    %237 = arith.addf %235, %236 : vector<8x32xf32>
    %238 = arith.addf %237, %230 : vector<8x32xf32>
    %239 = arith.subf %238, %218 : vector<8x32xf32>
    %240 = arith.subf %195, %239 : vector<8x32xf32>
    %c0_105 = arith.constant 0 : index
    %c0_106 = arith.constant 0 : index
    %241 = vector.load %arg3[%c0_105, %c0_106] : memref<8x32xf32, #tpu.memory_space<vmem>>, vector<8x32xf32>
    %242 = arith.subf %240, %241 : vector<8x32xf32>
    %cst_107 = arith.constant 9.99999993E-9 : f32
    %243 = vector.broadcast %cst_107 : f32 to vector<8x32xf32>
    %244 = arith.cmpf ogt, %1, %243 : vector<8x32xf32>
    %cst_108 = arith.constant 0.000000e+00 : f32
    %245 = vector.broadcast %cst_108 : f32 to vector<8x32xf32>
    %246 = arith.select %244, %242, %245 : vector<8x32xi1>, vector<8x32xf32>
    %247 = arith.addf %140, %246 : vector<8x32xf32>
    %cst_109 = arith.constant dense<0.000000e+00> : vector<8xf32>
    %248 = vector.multi_reduction <add>, %247, %cst_109 [1] : vector<8x32xf32> to vector<8xf32>
    %249 = vector.shape_cast %248 : vector<8xf32> to vector<8x1xf32>
    %cst_110 = arith.constant 0.000000e+00 : f32
    %250 = vector.broadcast %cst_110 : f32 to vector<8x1xf32>
    %251 = arith.subf %250, %249 : vector<8x1xf32>
    %c0_111 = arith.constant 0 : index
    %c0_112 = arith.constant 0 : index
    %252 = vector.load %arg26[%c0_111, %c0_112] : memref<8x1xf32, #tpu.memory_space<vmem>>, vector<8x1xf32>
    tpu.vector_store %arg26[%c0_111, %c0_112], %251 {strides = array<i32>} : memref<8x1xf32, #tpu.memory_space<vmem>>, vector<8x1xf32>,
    %253 = math.exp %100 : vector<8x16xf32>
    %254 = arith.subf %0, %99 : vector<8x16xf32>
    %cst_113 = arith.constant 1.83787704 : f32
    %255 = vector.broadcast %cst_113 : f32 to vector<8x16xf32>
    %256 = arith.addf %100, %255 : vector<8x16xf32>
    %cst_114 = arith.constant -5.000000e-01 : f32
    %257 = vector.broadcast %cst_114 : f32 to vector<8x16xf32>
    %258 = arith.mulf %257, %256 : vector<8x16xf32>
    %cst_115 = arith.constant 5.000000e-01 : f32
    %259 = vector.broadcast %cst_115 : f32 to vector<8x16xf32>
    %260 = arith.mulf %259, %254 : vector<8x16xf32>
    %261 = arith.mulf %260, %254 : vector<8x16xf32>
    %262 = tpu.reciprocal %253 {approx = true} : vector<8x16xf32> -> vector<8x16xf32>
    %263 = arith.mulf %261, %262 : vector<8x16xf32>
    %264 = arith.subf %258, %263 : vector<8x16xf32>
    %cst_116 = arith.constant dense<0.000000e+00> : vector<8xf32>
    %265 = vector.multi_reduction <add>, %264, %cst_116 [1] : vector<8x16xf32> to vector<8xf32>
    %266 = vector.shape_cast %265 : vector<8xf32> to vector<8x1xf32>
    %cst_117 = arith.constant 0.000000e+00 : f32
    %267 = vector.broadcast %cst_117 : f32 to vector<8x1xf32>
    %268 = arith.subf %267, %266 : vector<8x1xf32>
    %c0_118 = arith.constant 0 : index
    %c0_119 = arith.constant 0 : index
    %269 = vector.load %arg27[%c0_118, %c0_119] : memref<8x1xf32, #tpu.memory_space<vmem>>, vector<8x1xf32>
    tpu.vector_store %arg27[%c0_118, %c0_119], %268 {strides = array<i32>} : memref<8x1xf32, #tpu.memory_space<vmem>>, vector<8x1xf32>,
    return
  }
  func.func @transform_0(%arg0: i32) -> (i32, i32) {
    %c0_i32 = arith.constant 0 : i32
    %c0_i32_0 = arith.constant 0 : i32
    return %arg0, %c0_i32 : i32, i32
  }
  func.func @transform_1(%arg0: i32) -> (i32, i32) {
    %c0_i32 = arith.constant 0 : i32
    %c0_i32_0 = arith.constant 0 : i32
    return %arg0, %c0_i32 : i32, i32
  }
  func.func @transform_2(%arg0: i32) -> (i32, i32) {
    %c0_i32 = arith.constant 0 : i32
    %c0_i32_0 = arith.constant 0 : i32
    return %arg0, %c0_i32 : i32, i32
  }
  func.func @transform_3(%arg0: i32) -> (i32, i32) {
    %c0_i32 = arith.constant 0 : i32
    %c0_i32_0 = arith.constant 0 : i32
    return %arg0, %c0_i32 : i32, i32
  }
  func.func @transform_4(%arg0: i32) -> (i32, i32) {
    %c0_i32 = arith.constant 0 : i32
    %c0_i32_0 = arith.constant 0 : i32
    %c0_i32_1 = arith.constant 0 : i32
    return %c0_i32, %c0_i32_0 : i32, i32
  }
  func.func @transform_5(%arg0: i32) -> (i32, i32) {
    %c0_i32 = arith.constant 0 : i32
    %c0_i32_0 = arith.constant 0 : i32
    %c0_i32_1 = arith.constant 0 : i32
    return %c0_i32, %c0_i32_0 : i32, i32
  }
  func.func @transform_6(%arg0: i32) -> (i32, i32) {
    %c0_i32 = arith.constant 0 : i32
    %c0_i32_0 = arith.constant 0 : i32
    %c0_i32_1 = arith.constant 0 : i32
    return %c0_i32, %c0_i32_0 : i32, i32
  }
  func.func @transform_7(%arg0: i32) -> (i32, i32) {
    %c0_i32 = arith.constant 0 : i32
    %c0_i32_0 = arith.constant 0 : i32
    %c0_i32_1 = arith.constant 0 : i32
    return %c0_i32, %c0_i32_0 : i32, i32
  }
  func.func @transform_8(%arg0: i32) -> (i32, i32) {
    %c0_i32 = arith.constant 0 : i32
    %c0_i32_0 = arith.constant 0 : i32
    %c0_i32_1 = arith.constant 0 : i32
    return %c0_i32, %c0_i32_0 : i32, i32
  }
  func.func @transform_9(%arg0: i32) -> (i32, i32) {
    %c0_i32 = arith.constant 0 : i32
    %c0_i32_0 = arith.constant 0 : i32
    %c0_i32_1 = arith.constant 0 : i32
    return %c0_i32, %c0_i32_0 : i32, i32
  }
  func.func @transform_10(%arg0: i32) -> (i32, i32) {
    %c0_i32 = arith.constant 0 : i32
    %c0_i32_0 = arith.constant 0 : i32
    %c0_i32_1 = arith.constant 0 : i32
    return %c0_i32, %c0_i32_0 : i32, i32
  }
  func.func @transform_11(%arg0: i32) -> (i32, i32) {
    %c0_i32 = arith.constant 0 : i32
    %c0_i32_0 = arith.constant 0 : i32
    %c0_i32_1 = arith.constant 0 : i32
    return %c0_i32, %c0_i32_0 : i32, i32
  }
  func.func @transform_12(%arg0: i32) -> (i32, i32) {
    %c0_i32 = arith.constant 0 : i32
    %c0_i32_0 = arith.constant 0 : i32
    %c0_i32_1 = arith.constant 0 : i32
    return %c0_i32, %c0_i32_0 : i32, i32
  }
  func.func @transform_13(%arg0: i32) -> (i32, i32) {
    %c0_i32 = arith.constant 0 : i32
    %c0_i32_0 = arith.constant 0 : i32
    %c0_i32_1 = arith.constant 0 : i32
    return %c0_i32, %c0_i32_0 : i32, i32
  }
  func.func @transform_14(%arg0: i32) -> (i32, i32) {
    %c0_i32 = arith.constant 0 : i32
    %c0_i32_0 = arith.constant 0 : i32
    %c0_i32_1 = arith.constant 0 : i32
    return %c0_i32, %c0_i32_0 : i32, i32
  }
  func.func @transform_15(%arg0: i32) -> (i32, i32) {
    %c0_i32 = arith.constant 0 : i32
    %c0_i32_0 = arith.constant 0 : i32
    %c0_i32_1 = arith.constant 0 : i32
    return %c0_i32, %c0_i32_0 : i32, i32
  }
  func.func @transform_16(%arg0: i32) -> (i32, i32) {
    %c0_i32 = arith.constant 0 : i32
    %c0_i32_0 = arith.constant 0 : i32
    %c0_i32_1 = arith.constant 0 : i32
    return %c0_i32, %c0_i32_0 : i32, i32
  }
  func.func @transform_17(%arg0: i32) -> (i32, i32) {
    %c0_i32 = arith.constant 0 : i32
    %c0_i32_0 = arith.constant 0 : i32
    return %arg0, %c0_i32 : i32, i32
  }
  func.func @transform_18(%arg0: i32) -> (i32, i32) {
    %c0_i32 = arith.constant 0 : i32
    %c0_i32_0 = arith.constant 0 : i32
    return %arg0, %c0_i32 : i32, i32
  }
  func.func @transform_19(%arg0: i32) -> (i32, i32) {
    %c0_i32 = arith.constant 0 : i32
    %c0_i32_0 = arith.constant 0 : i32
    return %arg0, %c0_i32 : i32, i32
  }
  func.func @transform_20(%arg0: i32) -> (i32, i32) {
    %c0_i32 = arith.constant 0 : i32
    %c0_i32_0 = arith.constant 0 : i32
    return %arg0, %c0_i32 : i32, i32
  }
  func.func @transform_21(%arg0: i32) -> (i32, i32) {
    %c0_i32 = arith.constant 0 : i32
    %c0_i32_0 = arith.constant 0 : i32
    return %arg0, %c0_i32 : i32, i32
  }
  func.func @transform_22(%arg0: i32) -> (i32, i32) {
    %c0_i32 = arith.constant 0 : i32
    %c0_i32_0 = arith.constant 0 : i32
    return %arg0, %c0_i32 : i32, i32
  }
  func.func @transform_23(%arg0: i32) -> (i32, i32) {
    %c0_i32 = arith.constant 0 : i32
    %c0_i32_0 = arith.constant 0 : i32
    return %arg0, %c0_i32 : i32, i32
  }
  func.func @transform_24(%arg0: i32) -> (i32, i32) {
    %c0_i32 = arith.constant 0 : i32
    %c0_i32_0 = arith.constant 0 : i32
    return %arg0, %c0_i32 : i32, i32
  }
  func.func @transform_25(%arg0: i32) -> (i32, i32) {
    %c0_i32 = arith.constant 0 : i32
    %c0_i32_0 = arith.constant 0 : i32
    return %arg0, %c0_i32 : i32, i32
  }
  func.func @transform_26(%arg0: i32) -> (i32, i32) {
    %c0_i32 = arith.constant 0 : i32
    %c0_i32_0 = arith.constant 0 : i32
    return %arg0, %c0_i32 : i32, i32
  }
}

</mosaic_0001>

<llo_original>
// kernel: tpu_custom_call.1
$region0: #{tpu_custom_call.1}
  #allocation0 [shape = 'u32[]', space=smem, size = 0x4, offset = 0x4, fixed_abs, tag = 'smem constant byte address 0x4 - core index']
  #allocation1 [shape = 'u32[144,128]{1,0:T(1,128)}', space=vmem, size = 0x12000, scoped, tag = 'internal scratch']
  %s0 = inlined_call_operand.hbm [shape: f32[8,16], index: 0, kind: input, shape index: {}]
  %s1 = inlined_call_operand.hbm [shape: f32[8,32], index: 1, kind: input, shape index: {}]
  %s2 = inlined_call_operand.hbm [shape: f32[8,32], index: 2, kind: input, shape index: {}]
  %s3 = inlined_call_operand.hbm [shape: f32[8,16], index: 3, kind: input, shape index: {}]
  %s4 = inlined_call_operand.hbm [shape: bf16[16,32], index: 4, kind: input, shape index: {}]
  %s5 = inlined_call_operand.vmem [shape: f32[1,32], index: 5, kind: input, shape index: {}]
  %s6 = inlined_call_operand.vmem [shape: bf16[32,32], index: 6, kind: input, shape index: {}]
  %s7 = inlined_call_operand.hbm [shape: f32[1,32], index: 7, kind: input, shape index: {}]
  %s8 = inlined_call_operand.hbm [shape: bf16[32,32], index: 8, kind: input, shape index: {}]
  %s9 = inlined_call_operand.vmem [shape: bf16[32,32], index: 9, kind: input, shape index: {}]
  %s10 = inlined_call_operand.hbm [shape: f32[1,32], index: 10, kind: input, shape index: {}]
  %s11 = inlined_call_operand.hbm [shape: bf16[16,32], index: 11, kind: input, shape index: {}]
  %s12 = inlined_call_operand.hbm [shape: f32[1,32], index: 12, kind: input, shape index: {}]
  %s13 = inlined_call_operand.vmem [shape: bf16[32,96], index: 13, kind: input, shape index: {}]
  %s14 = inlined_call_operand.vmem [shape: f32[1,96], index: 14, kind: input, shape index: {}]
  %s15 = inlined_call_operand.hbm [shape: bf16[32,48], index: 15, kind: input, shape index: {}]
  %s16 = inlined_call_operand.vmem [shape: f32[1,48], index: 16, kind: input, shape index: {}]
  %s17 = inlined_call_operand.hbm [shape: f32[8,64], index: 17, kind: output, shape index: {0}]
  %s18 = inlined_call_operand.hbm [shape: f32[8,16], index: 18, kind: output, shape index: {1}]
  %s19 = inlined_call_operand.hbm [shape: f32[8,16], index: 19, kind: output, shape index: {2}]
  %s20 = inlined_call_operand.hbm [shape: f32[8,16], index: 20, kind: output, shape index: {3}]
  %s21 = inlined_call_operand.hbm [shape: f32[8,32], index: 21, kind: output, shape index: {4}]
  %s22 = inlined_call_operand.hbm [shape: f32[8,96], index: 22, kind: output, shape index: {5}]
  %s23 = inlined_call_operand.hbm [shape: f32[8,48], index: 23, kind: output, shape index: {6}]
  %s24 = inlined_call_operand.vmem [shape: f32[8,1], index: 24, kind: output, shape index: {7}]
  %s25 = inlined_call_operand.vmem [shape: f32[8,1], index: 25, kind: output, shape index: {8}]
  %s26 = inlined_call_operand.vmem [shape: f32[8,1], index: 26, kind: output, shape index: {9}]
  %27 = xla_tuple %s17, %s18, %s19, %s20, %s21, %s22, %s23, %s24, %s25, %s26
  %s28 = sld [smem:[#allocation0]]
  $region194: #{tpu_custom_call.1} parent=0
    _
  %s30 = ssub.s32 1, %s28
  %s31 = scalar_select 0, %s30, %s28
  $region1: #{tpu_custom_call.1} parent=0
    #allocation2 [shape = 'u8[4096]{0}', space=vmem, size = 0x1000, scoped, tag = 'input window, operand 0, single buffered']
    #allocation3 [shape = 's32[1]{0}', space=sflag, size = 0x4, scoped, tag = 'scoped memory for tpu_custom_call.1']
    #allocation4 [shape = 's32[1]{0}', space=sflag, size = 0x4, scoped, tag = 'scoped memory for tpu_custom_call.1']
    #allocation5 [shape = 'u8[4096]{0}', space=vmem, size = 0x1000, scoped, tag = 'input window, operand 1, single buffered']
    #allocation6 [shape = 's32[1]{0}', space=sflag, size = 0x4, scoped, tag = 'scoped memory for tpu_custom_call.1']
    #allocation7 [shape = 'u8[4096]{0}', space=vmem, size = 0x1000, scoped, tag = 'input window, operand 2, single buffered']
    #allocation8 [shape = 'u8[4096]{0}', space=vmem, size = 0x1000, scoped, tag = 'input window, operand 3, single buffered']
    #allocation9 [shape = 's32[1]{0}', space=sflag, size = 0x4, scoped, tag = 'scoped memory for tpu_custom_call.1']
    #allocation10 [shape = 'u8[4096]{0}', space=vmem, size = 0x1000, scoped, tag = 'input window, operand 4, single buffered']
    #allocation11 [shape = 'u8[512]{0}', space=vmem, size = 0x400, scoped, tag = 'input window, operand 7, single buffered']
    #allocation12 [shape = 's32[1]{0}', space=sflag, size = 0x4, scoped, tag = 'scoped memory for tpu_custom_call.1']
    #allocation13 [shape = 'u8[8192]{0}', space=vmem, size = 0x2000, scoped, tag = 'input window, operand 8, single buffered']
    #allocation14 [shape = 'u8[512]{0}', space=vmem, size = 0x400, scoped, tag = 'input window, operand 10, single buffered']
    #allocation15 [shape = 's32[1]{0}', space=sflag, size = 0x4, scoped, tag = 'scoped memory for tpu_custom_call.1']
    #allocation16 [shape = 'u8[4096]{0}', space=vmem, size = 0x1000, scoped, tag = 'input window, operand 11, single buffered']
    #allocation17 [shape = 'u8[512]{0}', space=vmem, size = 0x400, scoped, tag = 'input window, operand 12, single buffered']
    #allocation18 [shape = 's32[1]{0}', space=sflag, size = 0x4, scoped, tag = 'scoped memory for tpu_custom_call.1']
    #allocation19 [shape = 'u8[8192]{0}', space=vmem, size = 0x2000, scoped, tag = 'input window, operand 15, single buffered']
    #allocation20 [shape = 'u8[4096]{0}', space=vmem, size = 0x1000, scoped, tag = 'output window, operand 0, single buffered']
    #allocation21 [shape = 'u8[4096]{0}', space=vmem, size = 0x1000, scoped, tag = 'output window, operand 1, single buffered']
    #allocation22 [shape = 's32[1]{0}', space=sflag, size = 0x4, scoped, tag = 'scoped memory for tpu_custom_call.1']
    #allocation23 [shape = 'u8[4096]{0}', space=vmem, size = 0x1000, scoped, tag = 'output window, operand 2, single buffered']
    #allocation24 [shape = 'u8[4096]{0}', space=vmem, size = 0x1000, scoped, tag = 'output window, operand 3, single buffered']
    #allocation25 [shape = 's32[1]{0}', space=sflag, size = 0x4, scoped, tag = 'scoped memory for tpu_custom_call.1']
    #allocation26 [shape = 'u8[4096]{0}', space=vmem, size = 0x1000, scoped, tag = 'output window, operand 4, single buffered']
    #allocation27 [shape = 'u8[4096]{0}', space=vmem, size = 0x1000, scoped, tag = 'output window, operand 5, single buffered']
    #allocation28 [shape = 's32[1]{0}', space=sflag, size = 0x4, scoped, tag = 'scoped memory for tpu_custom_call.1']
    #allocation29 [shape = 'u8[4096]{0}', space=vmem, size = 0x1000, scoped, tag = 'output window, operand 6, single buffered']
    %32 = vsyncpa [#allocation3], 0
    %33 = vsyncpa [#allocation6], 0
    %34 = vsyncpa [#allocation9], 0
    %35 = vsyncpa [#allocation12], 0
    %36 = vsyncpa [#allocation15], 0
    %37 = vsyncpa [#allocation18], 0
    %38 = vsyncpa [#allocation4], 0
    %39 = vsyncpa [#allocation22], 0
    %40 = vsyncpa [#allocation25], 0
    %41 = vsyncpa [#allocation28], 0
    // Predicated region
    $region2: #{tpu_custom_call.1} parent=1 // pred_check
      _
    $region3: #{tpu_custom_call.1} parent=1 // pred_check_branch
      %43 = sbr.rel (0) target = $region5
    $region4: #{tpu_custom_call.1} parent=1 // pred_region
      %s45 = ssub.s32 128, 128
      %46 = vsyncadd [#allocation3], %s45
      %s48 = sshll.u32 [#allocation2], 4
      %s49 = int_to_ptr.vmem [resolvable:$true] %s48
      %51 = dma.hbm_to_vmem [thread:$0]  %s0, 128, %s49, [#allocation3]
    $region5: #{tpu_custom_call.1} parent=1 // pred_fallthru
      _
    // Predicated region
    $region6: #{tpu_custom_call.1} parent=1 // pred_check
      _
    $region7: #{tpu_custom_call.1} parent=1 // pred_check_branch
      %53 = sbr.rel (0) target = $region9
    $region8: #{tpu_custom_call.1} parent=1 // pred_region
      %s55 = ssub.s32 128, 128
      %56 = vsyncadd [#allocation6], %s55
      %s58 = sshll.u32 [#allocation5], 4
      %s59 = int_to_ptr.vmem [resolvable:$true] %s58
      %61 = dma.hbm_to_vmem [thread:$0]  %s1, 128, %s59, [#allocation6]
    $region9: #{tpu_custom_call.1} parent=1 // pred_fallthru
      _
    // Predicated region
    $region10: #{tpu_custom_call.1} parent=1 // pred_check
      _
    $region11: #{tpu_custom_call.1} parent=1 // pred_check_branch
      %63 = sbr.rel (0) target = $region13
    $region12: #{tpu_custom_call.1} parent=1 // pred_region
      %s65 = ssub.s32 128, 128
      %66 = vsyncadd [#allocation6], %s65
      %s68 = sshll.u32 [#allocation7], 4
      %s69 = int_to_ptr.vmem [resolvable:$true] %s68
      %71 = dma.hbm_to_vmem [thread:$0]  %s2, 128, %s69, [#allocation6]
    $region13: #{tpu_custom_call.1} parent=1 // pred_fallthru
      _
    // Predicated region
    $region14: #{tpu_custom_call.1} parent=1 // pred_check
      _
    $region15: #{tpu_custom_call.1} parent=1 // pred_check_branch
      %73 = sbr.rel (0) target = $region17
    $region16: #{tpu_custom_call.1} parent=1 // pred_region
      %s75 = ssub.s32 128, 128
      %76 = vsyncadd [#allocation9], %s75
      %s78 = sshll.u32 [#allocation8], 4
      %s79 = int_to_ptr.vmem [resolvable:$true] %s78
      %81 = dma.hbm_to_vmem [thread:$0]  %s3, 128, %s79, [#allocation9]
    $region17: #{tpu_custom_call.1} parent=1 // pred_fallthru
      _
    // Predicated region
    $region18: #{tpu_custom_call.1} parent=1 // pred_check
      _
    $region19: #{tpu_custom_call.1} parent=1 // pred_check_branch
      %83 = sbr.rel (0) target = $region21
    $region20: #{tpu_custom_call.1} parent=1 // pred_region
      %s85 = ssub.s32 128, 128
      %86 = vsyncadd [#allocation9], %s85
      %s87 = sshll.u32 [#allocation10], 4
      %s88 = int_to_ptr.vmem [resolvable:$true] %s87
      %93 = dma.hbm_to_vmem [thread:$0]  %s4, 128, %s88, [#allocation9], 64, 64, 4
    $region21: #{tpu_custom_call.1} parent=1 // pred_fallthru
      _
    // Predicated region
    $region22: #{tpu_custom_call.1} parent=1 // pred_check
      _
    $region23: #{tpu_custom_call.1} parent=1 // pred_check_branch
      %95 = sbr.rel (0) target = $region25
    $region24: #{tpu_custom_call.1} parent=1 // pred_region
      _
    $region25: #{tpu_custom_call.1} parent=1 // pred_fallthru
      _
    // Predicated region
    $region26: #{tpu_custom_call.1} parent=1 // pred_check
      _
    $region27: #{tpu_custom_call.1} parent=1 // pred_check_branch
      %97 = sbr.rel (0) target = $region29
    $region28: #{tpu_custom_call.1} parent=1 // pred_region
      _
    $region29: #{tpu_custom_call.1} parent=1 // pred_fallthru
      _
    // Predicated region
    $region30: #{tpu_custom_call.1} parent=1 // pred_check
      _
    $region31: #{tpu_custom_call.1} parent=1 // pred_check_branch
      %99 = sbr.rel (0) target = $region33
    $region32: #{tpu_custom_call.1} parent=1 // pred_region
      %s101 = ssub.s32 16, 16
      %102 = vsyncadd [#allocation12], %s101
      %s104 = sshll.u32 [#allocation11], 4
      %s105 = int_to_ptr.vmem [resolvable:$true] %s104
      %107 = dma.hbm_to_vmem [thread:$0]  %s7, 16, %s105, [#allocation12]
    $region33: #{tpu_custom_call.1} parent=1 // pred_fallthru
      _
    // Predicated region
    $region34: #{tpu_custom_call.1} parent=1 // pred_check
      _
    $region35: #{tpu_custom_call.1} parent=1 // pred_check_branch
      %109 = sbr.rel (0) target = $region37
    $region36: #{tpu_custom_call.1} parent=1 // pred_region
      %s111 = ssub.s32 256, 256
      %112 = vsyncadd [#allocation12], %s111
      %s113 = sshll.u32 [#allocation13], 4
      %s114 = int_to_ptr.vmem [resolvable:$true] %s113
      %119 = dma.hbm_to_vmem [thread:$0]  %s8, 256, %s114, [#allocation12], 64, 64, 4
    $region37: #{tpu_custom_call.1} parent=1 // pred_fallthru
      _
    // Predicated region
    $region38: #{tpu_custom_call.1} parent=1 // pred_check
      _
    $region39: #{tpu_custom_call.1} parent=1 // pred_check_branch
      %121 = sbr.rel (0) target = $region41
    $region40: #{tpu_custom_call.1} parent=1 // pred_region
      _
    $region41: #{tpu_custom_call.1} parent=1 // pred_fallthru
      _
    // Predicated region
    $region42: #{tpu_custom_call.1} parent=1 // pred_check
      _
    $region43: #{tpu_custom_call.1} parent=1 // pred_check_branch
      %123 = sbr.rel (0) target = $region45
    $region44: #{tpu_custom_call.1} parent=1 // pred_region
      %s125 = ssub.s32 16, 16
      %126 = vsyncadd [#allocation15], %s125
      %s128 = sshll.u32 [#allocation14], 4
      %s129 = int_to_ptr.vmem [resolvable:$true] %s128
      %131 = dma.hbm_to_vmem [thread:$0]  %s10, 16, %s129, [#allocation15]
    $region45: #{tpu_custom_call.1} parent=1 // pred_fallthru
      _
    // Predicated region
    $region46: #{tpu_custom_call.1} parent=1 // pred_check
      _
    $region47: #{tpu_custom_call.1} parent=1 // pred_check_branch
      %133 = sbr.rel (0) target = $region49
    $region48: #{tpu_custom_call.1} parent=1 // pred_region
      %s135 = ssub.s32 128, 128
      %136 = vsyncadd [#allocation15], %s135
      %s137 = sshll.u32 [#allocation16], 4
      %s138 = int_to_ptr.vmem [resolvable:$true] %s137
      %143 = dma.hbm_to_vmem [thread:$0]  %s11, 128, %s138, [#allocation15], 64, 64, 4
    $region49: #{tpu_custom_call.1} parent=1 // pred_fallthru
      _
    // Predicated region
    $region50: #{tpu_custom_call.1} parent=1 // pred_check
      _
    $region51: #{tpu_custom_call.1} parent=1 // pred_check_branch
      %145 = sbr.rel (0) target = $region53
    $region52: #{tpu_custom_call.1} parent=1 // pred_region
      %s147 = ssub.s32 16, 16
      %148 = vsyncadd [#allocation18], %s147
      %s150 = sshll.u32 [#allocation17], 4
      %s151 = int_to_ptr.vmem [resolvable:$true] %s150
      %153 = dma.hbm_to_vmem [thread:$0]  %s12, 16, %s151, [#allocation18]
    $region53: #{tpu_custom_call.1} parent=1 // pred_fallthru
      _
    // Predicated region
    $region54: #{tpu_custom_call.1} parent=1 // pred_check
      _
    $region55: #{tpu_custom_call.1} parent=1 // pred_check_branch
      %155 = sbr.rel (0) target = $region57
    $region56: #{tpu_custom_call.1} parent=1 // pred_region
      _
    $region57: #{tpu_custom_call.1} parent=1 // pred_fallthru
      _
    // Predicated region
    $region58: #{tpu_custom_call.1} parent=1 // pred_check
      _
    $region59: #{tpu_custom_call.1} parent=1 // pred_check_branch
      %157 = sbr.rel (0) target = $region61
    $region60: #{tpu_custom_call.1} parent=1 // pred_region
      _
    $region61: #{tpu_custom_call.1} parent=1 // pred_fallthru
      _
    // Predicated region
    $region62: #{tpu_custom_call.1} parent=1 // pred_check
      _
    $region63: #{tpu_custom_call.1} parent=1 // pred_check_branch
      %159 = sbr.rel (0) target = $region65
    $region64: #{tpu_custom_call.1} parent=1 // pred_region
      %s161 = ssub.s32 256, 256
      %162 = vsyncadd [#allocation18], %s161
      %s163 = sshll.u32 [#allocation19], 4
      %s164 = int_to_ptr.vmem [resolvable:$true] %s163
      %169 = dma.hbm_to_vmem [thread:$0]  %s15, 256, %s164, [#allocation18], 64, 64, 4
    $region65: #{tpu_custom_call.1} parent=1 // pred_fallthru
      _
    // Predicated region
    $region66: #{tpu_custom_call.1} parent=1 // pred_check
      _
    $region67: #{tpu_custom_call.1} parent=1 // pred_check_branch
      %171 = sbr.rel (0) target = $region69
    $region68: #{tpu_custom_call.1} parent=1 // pred_region
      _
    $region69: #{tpu_custom_call.1} parent=1 // pred_fallthru
      _
    // Predicated region
    $region70: #{tpu_custom_call.1} parent=1 // pred_check
      _
    $region71: #{tpu_custom_call.1} parent=1 // pred_check_branch
      %173 = sbr.rel (0) target = $region73
    $region72: #{tpu_custom_call.1} parent=1 // pred_region
      %174 = dma.done [#allocation3], 128
    $region73: #{tpu_custom_call.1} parent=1 // pred_fallthru
      _
    // Predicated region
    $region74: #{tpu_custom_call.1} parent=1 // pred_check
      _
    $region75: #{tpu_custom_call.1} parent=1 // pred_check_branch
      %176 = sbr.rel (0) target = $region77
    $region76: #{tpu_custom_call.1} parent=1 // pred_region
      %177 = dma.done [#allocation6], 128
    $region77: #{tpu_custom_call.1} parent=1 // pred_fallthru
      _
    // Predicated region
    $region78: #{tpu_custom_call.1} parent=1 // pred_check
      _
    $region79: #{tpu_custom_call.1} parent=1 // pred_check_branch
      %179 = sbr.rel (0) target = $region81
    $region80: #{tpu_custom_call.1} parent=1 // pred_region
      %180 = dma.done [#allocation6], 128
    $region81: #{tpu_custom_call.1} parent=1 // pred_fallthru
      _
    // Predicated region
    $region82: #{tpu_custom_call.1} parent=1 // pred_check
      _
    $region83: #{tpu_custom_call.1} parent=1 // pred_check_branch
      %182 = sbr.rel (0) target = $region85
    $region84: #{tpu_custom_call.1} parent=1 // pred_region
      %183 = dma.done [#allocation9], 128
    $region85: #{tpu_custom_call.1} parent=1 // pred_fallthru
      _
    // Predicated region
    $region86: #{tpu_custom_call.1} parent=1 // pred_check
      _
    $region87: #{tpu_custom_call.1} parent=1 // pred_check_branch
      %185 = sbr.rel (0) target = $region89
    $region88: #{tpu_custom_call.1} parent=1 // pred_region
      %186 = dma.done [#allocation9], 128
    $region89: #{tpu_custom_call.1} parent=1 // pred_fallthru
      _
    // Predicated region
    $region90: #{tpu_custom_call.1} parent=1 // pred_check
      _
    $region91: #{tpu_custom_call.1} parent=1 // pred_check_branch
      %188 = sbr.rel (0) target = $region93
    $region92: #{tpu_custom_call.1} parent=1 // pred_region
      %189 = dma.done [#allocation12], 16
    $region93: #{tpu_custom_call.1} parent=1 // pred_fallthru
      _
    // Predicated region
    $region94: #{tpu_custom_call.1} parent=1 // pred_check
      _
    $region95: #{tpu_custom_call.1} parent=1 // pred_check_branch
      %191 = sbr.rel (0) target = $region97
    $region96: #{tpu_custom_call.1} parent=1 // pred_region
      %192 = dma.done [#allocation12], 256
    $region97: #{tpu_custom_call.1} parent=1 // pred_fallthru
      _
    // Predicated region
    $region98: #{tpu_custom_call.1} parent=1 // pred_check
      _
    $region99: #{tpu_custom_call.1} parent=1 // pred_check_branch
      %194 = sbr.rel (0) target = $region101
    $region100: #{tpu_custom_call.1} parent=1 // pred_region
      %195 = dma.done [#allocation15], 16
    $region101: #{tpu_custom_call.1} parent=1 // pred_fallthru
      _
    // Predicated region
    $region102: #{tpu_custom_call.1} parent=1 // pred_check
      _
    $region103: #{tpu_custom_call.1} parent=1 // pred_check_branch
      %197 = sbr.rel (0) target = $region105
    $region104: #{tpu_custom_call.1} parent=1 // pred_region
      %198 = dma.done [#allocation15], 128
    $region105: #{tpu_custom_call.1} parent=1 // pred_fallthru
      _
    // Predicated region
    $region106: #{tpu_custom_call.1} parent=1 // pred_check
      _
    $region107: #{tpu_custom_call.1} parent=1 // pred_check_branch
      %200 = sbr.rel (0) target = $region109
    $region108: #{tpu_custom_call.1} parent=1 // pred_region
      %201 = dma.done [#allocation18], 16
    $region109: #{tpu_custom_call.1} parent=1 // pred_fallthru
      _
    // Predicated region
    $region110: #{tpu_custom_call.1} parent=1 // pred_check
      _
    $region111: #{tpu_custom_call.1} parent=1 // pred_check_branch
      %203 = sbr.rel (0) target = $region113
    $region112: #{tpu_custom_call.1} parent=1 // pred_region
      %204 = dma.done [#allocation18], 256
    $region113: #{tpu_custom_call.1} parent=1 // pred_fallthru
      _
    %v206 = vld [vmem:[#allocation2] sm:$0xff]
    %v207 = vld [vmem:[#allocation5] sm:$0xff]
    %v208 = vadd.f32 %v207, 1.0
    %v209 = vlog2.pop %v208
    %v210 = vmul.f32 %v209, 0.6931472
    %v211 = vpack.c.bf16 %v206, %v206
    %v212 = vld [vmem:[#allocation10] sm:$0xf]
    %v213 = vld [vmem:[#allocation10 + $0x4] sm:$0xf]
    %v214 = vld [vmem:[%s5] sm:$0x1]
    %v216 = vlaneseq
    %v217 = vshrl.u32 %v216, 7
    %v218 = vsub.s32 0, %v217
    %v219 = vrot.slane %v214, %v218
    %v223 = vunpack.c.l.b16 %v212
    %v224 = vunpack.c.l.b16 %v213
    %v225 = vpack.c.b16 %v224, %v223
    %vm227 = vcmask 130048
    %v229 = vsel %vm227, %v211, 0
    %231 = vmatprep.subr.bf16.mxu0 0
    %232 = vmatpush1.bf16.msra.mxu0 %v225
    %233 = vmatprep.subr.bf16.mxu0 0
    %234 = vmatpush1.bf16.msra.mxu0 0
    %235 = vmatprep.subr.bf16.mxu0 0
    %236 = vmatpush1.bf16.msra.mxu0 0
    %237 = vmatprep.subr.bf16.mxu0 0
    %238 = vmatpush1.bf16.msra.mxu0 0
    %239 = vmatprep.subr.bf16.mxu0 0
    %240 = vmatpush1.bf16.msra.mxu0 0
    %241 = vmatprep.subr.bf16.mxu0 0
    %242 = vmatpush1.bf16.msra.mxu0 0
    %243 = vmatprep.subr.bf16.mxu0 0
    %244 = vmatpush1.bf16.msra.mxu0 0
    %245 = vmatprep.subr.bf16.mxu0 0
    %246 = vmatpush1.bf16.msra.mxu0 0
    %247 = vmatprep.subr.bf16.mxu0 0
    %248 = vmatpush1.bf16.msra.mxu0 0
    %249 = vmatprep.subr.bf16.mxu0 0
    %250 = vmatpush1.bf16.msra.mxu0 0
    %251 = vmatprep.subr.bf16.mxu0 0
    %252 = vmatpush1.bf16.msra.mxu0 0
    %253 = vmatprep.subr.bf16.mxu0 0
    %254 = vmatpush1.bf16.msra.mxu0 0
    %255 = vmatprep.subr.bf16.mxu0 0
    %256 = vmatpush1.bf16.msra.mxu0 0
    %257 = vmatprep.subr.bf16.mxu0 0
    %258 = vmatpush1.bf16.msra.mxu0 0
    %259 = vmatprep.subr.bf16.mxu0 0
    %260 = vmatpush1.bf16.msra.mxu0 0
    %261 = vmatprep.subr.bf16.mxu0 0
    %262 = vmatpush1.bf16.msra.mxu0 0
    %263 = vmatprep.mubr.bf16.mxu0 0
    %264 = vmatmul.mubr.bf16.gmra.mrb[0].mxu0 %v229
    %v265 = vpop.f32.mrb[0].mxu0
    %v266 = vadd.f32 %v219, %v265
    %v267 = vpop.f32.mrb[0].mxu0
    %v268 = vpop.f32.mrb[0].mxu0
    %v269 = vpop.f32.mrb[0].mxu0
    %270 = vdwg.mxu0
    %v271 = vmax.f32 %v266, 0.0
    %v272 = vpack.c.bf16 %v210, %v210
    %v273 = vld [vmem:[%s6] sm:$0xf]
    %v274 = vld [vmem:[%s6 + $0x4] sm:$0xf]
    %v275 = vld [vmem:[%s6 + $0x8] sm:$0xf]
    %v276 = vld [vmem:[%s6 + $0xc] sm:$0xf]
    %v277 = vld [vmem:[#allocation11] sm:$0x1]
    %v279 = vlaneseq
    %v280 = vshrl.u32 %v279, 7
    %v281 = vsub.s32 0, %v280
    %v282 = vrot.slane %v277, %v281
    %v288 = vunpack.c.l.b16 %v273
    %v289 = vunpack.c.l.b16 %v274
    %v290 = vunpack.c.l.b16 %v275
    %v291 = vunpack.c.l.b16 %v276
    %v292 = vpack.c.b16 %v289, %v288
    %v293 = vpack.c.b16 %v291, %v290
    %vm296 = vcmask 261120
    %v298 = vsel %vm296, %v272, 0
    %300 = vmatprep.subr.bf16.mxu0 0
    %301 = vmatpush1.bf16.msra.mxu0 %v292
    %302 = vmatprep.subr.bf16.mxu0 0
    %303 = vmatpush1.bf16.msra.mxu0 %v293
    %304 = vmatprep.subr.bf16.mxu0 0
    %305 = vmatpush1.bf16.msra.mxu0 0
    %306 = vmatprep.subr.bf16.mxu0 0
    %307 = vmatpush1.bf16.msra.mxu0 0
    %308 = vmatprep.subr.bf16.mxu0 0
    %309 = vmatpush1.bf16.msra.mxu0 0
    %310 = vmatprep.subr.bf16.mxu0 0
    %311 = vmatpush1.bf16.msra.mxu0 0
    %312 = vmatprep.subr.bf16.mxu0 0
    %313 = vmatpush1.bf16.msra.mxu0 0
    %314 = vmatprep.subr.bf16.mxu0 0
    %315 = vmatpush1.bf16.msra.mxu0 0
    %316 = vmatprep.subr.bf16.mxu0 0
    %317 = vmatpush1.bf16.msra.mxu0 0
    %318 = vmatprep.subr.bf16.mxu0 0
    %319 = vmatpush1.bf16.msra.mxu0 0
    %320 = vmatprep.subr.bf16.mxu0 0
    %321 = vmatpush1.bf16.msra.mxu0 0
    %322 = vmatprep.subr.bf16.mxu0 0
    %323 = vmatpush1.bf16.msra.mxu0 0
    %324 = vmatprep.subr.bf16.mxu0 0
    %325 = vmatpush1.bf16.msra.mxu0 0
    %326 = vmatprep.subr.bf16.mxu0 0
    %327 = vmatpush1.bf16.msra.mxu0 0
    %328 = vmatprep.subr.bf16.mxu0 0
    %329 = vmatpush1.bf16.msra.mxu0 0
    %330 = vmatprep.subr.bf16.mxu0 0
    %331 = vmatpush1.bf16.msra.mxu0 0
    %332 = vmatprep.mubr.bf16.mxu0 0
    %333 = vmatmul.mubr.bf16.gmra.mrb[0].mxu0 %v298
    %v334 = vpop.f32.mrb[0].mxu0
    %v335 = vadd.f32 %v282, %v334
    %v336 = vpop.f32.mrb[0].mxu0
    %v337 = vpop.f32.mrb[0].mxu0
    %v338 = vpop.f32.mrb[0].mxu0
    %339 = vdwg.mxu0
    %v340 = vmax.f32 %v335, 0.0
    %342 = vrot.lane.b32.xlu0 %v340, 32
    %v343 = vpop.permute.xlu0 %342
    %v345 = vsel %vm296, %v271, %v343
    %vm346 = vcmask 523264
    %347 = vst.msk [vmem:[#allocation20] sm:$0xff] %vm346, %v345
    %v348 = vpack.c.bf16 %v271, %v271
    %v349 = vld [vmem:[#allocation13] sm:$0xf]
    %v350 = vld [vmem:[#allocation13 + $0x4] sm:$0xf]
    %v351 = vld [vmem:[#allocation13 + $0x8] sm:$0xf]
    %v352 = vld [vmem:[#allocation13 + $0xc] sm:$0xf]
    %v353 = vpack.c.bf16 %v340, %v340
    %v354 = vld [vmem:[%s9] sm:$0xf]
    %v355 = vld [vmem:[%s9 + $0x4] sm:$0xf]
    %v356 = vld [vmem:[%s9 + $0x8] sm:$0xf]
    %v357 = vld [vmem:[%s9 + $0xc] sm:$0xf]
    %v362 = vunpack.c.l.b16 %v354
    %v363 = vunpack.c.l.b16 %v355
    %v364 = vunpack.c.l.b16 %v356
    %v365 = vunpack.c.l.b16 %v357
    %v366 = vpack.c.b16 %v363, %v362
    %v367 = vpack.c.b16 %v365, %v364
    %v371 = vsel %vm296, %v353, 0
    %373 = vmatprep.subr.bf16.mxu0 0
    %374 = vmatpush1.bf16.msra.mxu0 %v366
    %375 = vmatprep.subr.bf16.mxu0 0
    %376 = vmatpush1.bf16.msra.mxu0 %v367
    %377 = vmatprep.subr.bf16.mxu0 0
    %378 = vmatpush1.bf16.msra.mxu0 0
    %379 = vmatprep.subr.bf16.mxu0 0
    %380 = vmatpush1.bf16.msra.mxu0 0
    %381 = vmatprep.subr.bf16.mxu0 0
    %382 = vmatpush1.bf16.msra.mxu0 0
    %383 = vmatprep.subr.bf16.mxu0 0
    %384 = vmatpush1.bf16.msra.mxu0 0
    %385 = vmatprep.subr.bf16.mxu0 0
    %386 = vmatpush1.bf16.msra.mxu0 0
    %387 = vmatprep.subr.bf16.mxu0 0
    %388 = vmatpush1.bf16.msra.mxu0 0
    %389 = vmatprep.subr.bf16.mxu0 0
    %390 = vmatpush1.bf16.msra.mxu0 0
    %391 = vmatprep.subr.bf16.mxu0 0
    %392 = vmatpush1.bf16.msra.mxu0 0
    %393 = vmatprep.subr.bf16.mxu0 0
    %394 = vmatpush1.bf16.msra.mxu0 0
    %395 = vmatprep.subr.bf16.mxu0 0
    %396 = vmatpush1.bf16.msra.mxu0 0
    %397 = vmatprep.subr.bf16.mxu0 0
    %398 = vmatpush1.bf16.msra.mxu0 0
    %399 = vmatprep.subr.bf16.mxu0 0
    %400 = vmatpush1.bf16.msra.mxu0 0
    %401 = vmatprep.subr.bf16.mxu0 0
    %402 = vmatpush1.bf16.msra.mxu0 0
    %403 = vmatprep.subr.bf16.mxu0 0
    %404 = vmatpush1.bf16.msra.mxu0 0
    %405 = vmatprep.mubr.bf16.mxu0 0
    %406 = vmatmul.mubr.bf16.gmra.mrb[0].mxu0 %v371
    %v407 = vpop.f32.mrb[0].mxu0
    %v408 = vadd.f32 0.0, %v407
    %v409 = vpop.f32.mrb[0].mxu0
    %v410 = vpop.f32.mrb[0].mxu0
    %v411 = vpop.f32.mrb[0].mxu0
    %412 = vdwg.mxu0
    %v417 = vunpack.c.l.b16 %v349
    %v418 = vunpack.c.l.b16 %v350
    %v419 = vunpack.c.l.b16 %v351
    %v420 = vunpack.c.l.b16 %v352
    %v421 = vpack.c.b16 %v418, %v417
    %v422 = vpack.c.b16 %v420, %v419
    %v426 = vsel %vm296, %v348, 0
    %428 = vmatprep.subr.bf16.mxu0 0
    %429 = vmatpush1.bf16.msra.mxu0 %v421
    %430 = vmatprep.subr.bf16.mxu0 0
    %431 = vmatpush1.bf16.msra.mxu0 %v422
    %432 = vmatprep.subr.bf16.mxu0 0
    %433 = vmatpush1.bf16.msra.mxu0 0
    %434 = vmatprep.subr.bf16.mxu0 0
    %435 = vmatpush1.bf16.msra.mxu0 0
    %436 = vmatprep.subr.bf16.mxu0 0
    %437 = vmatpush1.bf16.msra.mxu0 0
    %438 = vmatprep.subr.bf16.mxu0 0
    %439 = vmatpush1.bf16.msra.mxu0 0
    %440 = vmatprep.subr.bf16.mxu0 0
    %441 = vmatpush1.bf16.msra.mxu0 0
    %442 = vmatprep.subr.bf16.mxu0 0
    %443 = vmatpush1.bf16.msra.mxu0 0
    %444 = vmatprep.subr.bf16.mxu0 0
    %445 = vmatpush1.bf16.msra.mxu0 0
    %446 = vmatprep.subr.bf16.mxu0 0
    %447 = vmatpush1.bf16.msra.mxu0 0
    %448 = vmatprep.subr.bf16.mxu0 0
    %449 = vmatpush1.bf16.msra.mxu0 0
    %450 = vmatprep.subr.bf16.mxu0 0
    %451 = vmatpush1.bf16.msra.mxu0 0
    %452 = vmatprep.subr.bf16.mxu0 0
    %453 = vmatpush1.bf16.msra.mxu0 0
    %454 = vmatprep.subr.bf16.mxu0 0
    %455 = vmatpush1.bf16.msra.mxu0 0
    %456 = vmatprep.subr.bf16.mxu0 0
    %457 = vmatpush1.bf16.msra.mxu0 0
    %458 = vmatprep.subr.bf16.mxu0 0
    %459 = vmatpush1.bf16.msra.mxu0 0
    %460 = vmatprep.mubr.bf16.mxu0 0
    %461 = vmatmul.mubr.bf16.gmra.mrb[0].mxu0 %v426
    %v462 = vpop.f32.mrb[0].mxu0
    %v463 = vadd.f32 %v408, %v462
    %v464 = vpop.f32.mrb[0].mxu0
    %v465 = vpop.f32.mrb[0].mxu0
    %v466 = vpop.f32.mrb[0].mxu0
    %467 = vdwg.mxu0
    %v468 = vld [vmem:[#allocation14] sm:$0x1]
    %v470 = vlaneseq
    %v471 = vshrl.u32 %v470, 7
    %v472 = vsub.s32 0, %v471
    %v473 = vrot.slane %v468, %v472
    %v475 = vadd.f32 %v463, %v473
    %v476 = vmul.f32 %v475, 1.442695
    %v477 = vpow.pop %v476
    %v478 = vadd.f32 %v477, 0.0001
    %v479 = vrsqrt.pop %v478
    %v480 = vmul.f32 %v478, %v479
    %vm481 = vcmp.eq.f32.partialorder %v478, inf
    %v482 = vsel %vm481, %v478, %v480
    %vm483 = vcmp.eq.f32.partialorder %v478, 0.0
    %v484 = vand.u32 %v478, 2147483648
    %v485 = vsel %vm483, %v484, %v482
    %v486 = vld [vmem:[#allocation8] sm:$0xff]
    %488 = vrot.lane.b32.xlu0 %v486, 16
    %v489 = vpop.permute.xlu0 %488
    %v491 = vmul.f32 %v485, %v489
    %493 = vrot.lane.b32.xlu0 %v491, 112
    %v494 = vpop.permute.xlu0 %493
    %v496 = vadd.f32 %v475, %v494
    %497 = vst.msk [vmem:[#allocation21] sm:$0xff] %vm227, %v475
    %499 = vrot.lane.b32.xlu0 %v478, 112
    %v500 = vpop.permute.xlu0 %499
    %502 = vst.msk [vmem:[#allocation23] sm:$0xff] %vm227, %v500
    %503 = vst.msk [vmem:[#allocation24] sm:$0xff] %vm227, %v496
    %v504 = vmul.f32 %v475, %v475
    %506 = vrot.lane.b32.xlu0 %v504, 16
    %v507 = vpop.permute.xlu0 %506
    %v509 = vadd.f32 %v478, %v507
    %v510 = vsub.f32 %v509, 1.0
    %v511 = vmul.f32 %v510, 0.5
    %v512 = vlog2.pop %v478
    %v513 = vmul.f32 %v512, 0.6931472
    %v514 = vmul.f32 %v513, 0.5
    %v515 = vsub.f32 %v511, %v514
    %517 = vrot.lane.b32.xlu0 %v515, 112
    %v518 = vpop.permute.xlu0 %517
    %v520 = vsel %vm227, %v518, 0.0
    %521 = vadd.xlane.f32.xlu0 %v520
    %v522 = vpop.xlane.xlu0 %521
    %vm523 = vcmask 7168
    %524 = vst.msk [vmem:[%s24] sm:$0xff] %vm523, %v522
    %v525 = vpack.c.bf16 %v496, %v496
    %v526 = vld [vmem:[#allocation16] sm:$0xf]
    %v527 = vld [vmem:[#allocation16 + $0x4] sm:$0xf]
    %v528 = vld [vmem:[#allocation17] sm:$0x1]
    %v530 = vlaneseq
    %v531 = vshrl.u32 %v530, 7
    %v532 = vsub.s32 0, %v531
    %v533 = vrot.slane %v528, %v532
    %v537 = vunpack.c.l.b16 %v526
    %v538 = vunpack.c.l.b16 %v527
    %v539 = vpack.c.b16 %v538, %v537
    %v542 = vsel %vm227, %v525, 0
    %544 = vmatprep.subr.bf16.mxu0 0
    %545 = vmatpush1.bf16.msra.mxu0 %v539
    %546 = vmatprep.subr.bf16.mxu0 0
    %547 = vmatpush1.bf16.msra.mxu0 0
    %548 = vmatprep.subr.bf16.mxu0 0
    %549 = vmatpush1.bf16.msra.mxu0 0
    %550 = vmatprep.subr.bf16.mxu0 0
    %551 = vmatpush1.bf16.msra.mxu0 0
    %552 = vmatprep.subr.bf16.mxu0 0
    %553 = vmatpush1.bf16.msra.mxu0 0
    %554 = vmatprep.subr.bf16.mxu0 0
    %555 = vmatpush1.bf16.msra.mxu0 0
    %556 = vmatprep.subr.bf16.mxu0 0
    %557 = vmatpush1.bf16.msra.mxu0 0
    %558 = vmatprep.subr.bf16.mxu0 0
    %559 = vmatpush1.bf16.msra.mxu0 0
    %560 = vmatprep.subr.bf16.mxu0 0
    %561 = vmatpush1.bf16.msra.mxu0 0
    %562 = vmatprep.subr.bf16.mxu0 0
    %563 = vmatpush1.bf16.msra.mxu0 0
    %564 = vmatprep.subr.bf16.mxu0 0
    %565 = vmatpush1.bf16.msra.mxu0 0
    %566 = vmatprep.subr.bf16.mxu0 0
    %567 = vmatpush1.bf16.msra.mxu0 0
    %568 = vmatprep.subr.bf16.mxu0 0
    %569 = vmatpush1.bf16.msra.mxu0 0
    %570 = vmatprep.subr.bf16.mxu0 0
    %571 = vmatpush1.bf16.msra.mxu0 0
    %572 = vmatprep.subr.bf16.mxu0 0
    %573 = vmatpush1.bf16.msra.mxu0 0
    %574 = vmatprep.subr.bf16.mxu0 0
    %575 = vmatpush1.bf16.msra.mxu0 0
    %576 = vmatprep.mubr.bf16.mxu0 0
    %577 = vmatmul.mubr.bf16.gmra.mrb[0].mxu0 %v542
    %v578 = vpop.f32.mrb[0].mxu0
    %v579 = vadd.f32 %v533, %v578
    %v580 = vpop.f32.mrb[0].mxu0
    %v581 = vpop.f32.mrb[0].mxu0
    %v582 = vpop.f32.mrb[0].mxu0
    %583 = vdwg.mxu0
    %v584 = vmax.f32 %v579, 0.0
    %585 = vst.msk [vmem:[#allocation26] sm:$0xff] %vm296, %v584
    %v586 = vsel %vm296, %v207, 0.0
    %587 = vadd.xlane.f32.xlu0 %v586
    %v588 = vpop.xlane.xlu0 %587
    %v589 = vpack.c.bf16 %v584, %v584
    %v590 = vld [vmem:[%s13] sm:$0xf]
    %v591 = vld [vmem:[%s13 + $0x4] sm:$0xf]
    %v592 = vld [vmem:[%s13 + $0x8] sm:$0xf]
    %v593 = vld [vmem:[%s13 + $0xc] sm:$0xf]
    %v594 = vld [vmem:[%s14] sm:$0x1]
    %v596 = vlaneseq
    %v597 = vshrl.u32 %v596, 7
    %v598 = vsub.s32 0, %v597
    %v599 = vrot.slane %v594, %v598
    %v605 = vunpack.c.l.b16 %v590
    %v606 = vunpack.c.l.b16 %v591
    %v607 = vunpack.c.l.b16 %v592
    %v608 = vunpack.c.l.b16 %v593
    %v609 = vpack.c.b16 %v606, %v605
    %v610 = vpack.c.b16 %v608, %v607
    %v614 = vsel %vm296, %v589, 0
    %616 = vmatprep.subr.bf16.mxu0 0
    %617 = vmatpush1.bf16.msra.mxu0 %v609
    %618 = vmatprep.subr.bf16.mxu0 0
    %619 = vmatpush1.bf16.msra.mxu0 %v610
    %620 = vmatprep.subr.bf16.mxu0 0
    %621 = vmatpush1.bf16.msra.mxu0 0
    %622 = vmatprep.subr.bf16.mxu0 0
    %623 = vmatpush1.bf16.msra.mxu0 0
    %624 = vmatprep.subr.bf16.mxu0 0
    %625 = vmatpush1.bf16.msra.mxu0 0
    %626 = vmatprep.subr.bf16.mxu0 0
    %627 = vmatpush1.bf16.msra.mxu0 0
    %628 = vmatprep.subr.bf16.mxu0 0
    %629 = vmatpush1.bf16.msra.mxu0 0
    %630 = vmatprep.subr.bf16.mxu0 0
    %631 = vmatpush1.bf16.msra.mxu0 0
    %632 = vmatprep.subr.bf16.mxu0 0
    %633 = vmatpush1.bf16.msra.mxu0 0
    %634 = vmatprep.subr.bf16.mxu0 0
    %635 = vmatpush1.bf16.msra.mxu0 0
    %636 = vmatprep.subr.bf16.mxu0 0
    %637 = vmatpush1.bf16.msra.mxu0 0
    %638 = vmatprep.subr.bf16.mxu0 0
    %639 = vmatpush1.bf16.msra.mxu0 0
    %640 = vmatprep.subr.bf16.mxu0 0
    %641 = vmatpush1.bf16.msra.mxu0 0
    %642 = vmatprep.subr.bf16.mxu0 0
    %643 = vmatpush1.bf16.msra.mxu0 0
    %644 = vmatprep.subr.bf16.mxu0 0
    %645 = vmatpush1.bf16.msra.mxu0 0
    %646 = vmatprep.subr.bf16.mxu0 0
    %647 = vmatpush1.bf16.msra.mxu0 0
    %648 = vmatprep.mubr.bf16.mxu0 0
    %649 = vmatmul.mubr.bf16.gmra.mrb[0].mxu0 %v614
    %v650 = vpop.f32.mrb[0].mxu0
    %v651 = vadd.f32 %v599, %v650
    %v652 = vpop.f32.mrb[0].mxu0
    %v653 = vpop.f32.mrb[0].mxu0
    %v654 = vpop.f32.mrb[0].mxu0
    %655 = vdwg.mxu0
    %v656 = vld [vmem:[#allocation19] sm:$0xf]
    %v657 = vld [vmem:[#allocation19 + $0x4] sm:$0xf]
    %v658 = vld [vmem:[#allocation19 + $0x8] sm:$0xf]
    %v659 = vld [vmem:[#allocation19 + $0xc] sm:$0xf]
    %v660 = vld [vmem:[%s16] sm:$0x1]
    %v662 = vlaneseq
    %v663 = vshrl.u32 %v662, 7
    %v664 = vsub.s32 0, %v663
    %v665 = vrot.slane %v660, %v664
    %v671 = vunpack.c.l.b16 %v656
    %v672 = vunpack.c.l.b16 %v657
    %v673 = vunpack.c.l.b16 %v658
    %v674 = vunpack.c.l.b16 %v659
    %v675 = vpack.c.b16 %v672, %v671
    %v676 = vpack.c.b16 %v674, %v673
    %679 = vmatprep.subr.bf16.mxu0 0
    %680 = vmatpush1.bf16.msra.mxu0 %v675
    %681 = vmatprep.subr.bf16.mxu0 0
    %682 = vmatpush1.bf16.msra.mxu0 %v676
    %683 = vmatprep.subr.bf16.mxu0 0
    %684 = vmatpush1.bf16.msra.mxu0 0
    %685 = vmatprep.subr.bf16.mxu0 0
    %686 = vmatpush1.bf16.msra.mxu0 0
    %687 = vmatprep.subr.bf16.mxu0 0
    %688 = vmatpush1.bf16.msra.mxu0 0
    %689 = vmatprep.subr.bf16.mxu0 0
    %690 = vmatpush1.bf16.msra.mxu0 0
    %691 = vmatprep.subr.bf16.mxu0 0
    %692 = vmatpush1.bf16.msra.mxu0 0
    %693 = vmatprep.subr.bf16.mxu0 0
    %694 = vmatpush1.bf16.msra.mxu0 0
    %695 = vmatprep.subr.bf16.mxu0 0
    %696 = vmatpush1.bf16.msra.mxu0 0
    %697 = vmatprep.subr.bf16.mxu0 0
    %698 = vmatpush1.bf16.msra.mxu0 0
    %699 = vmatprep.subr.bf16.mxu0 0
    %700 = vmatpush1.bf16.msra.mxu0 0
    %701 = vmatprep.subr.bf16.mxu0 0
    %702 = vmatpush1.bf16.msra.mxu0 0
    %703 = vmatprep.subr.bf16.mxu0 0
    %704 = vmatpush1.bf16.msra.mxu0 0
    %705 = vmatprep.subr.bf16.mxu0 0
    %706 = vmatpush1.bf16.msra.mxu0 0
    %707 = vmatprep.subr.bf16.mxu0 0
    %708 = vmatpush1.bf16.msra.mxu0 0
    %709 = vmatprep.subr.bf16.mxu0 0
    %710 = vmatpush1.bf16.msra.mxu0 0
    %711 = vmatprep.mubr.bf16.mxu0 0
    %712 = vmatmul.mubr.bf16.gmra.mrb[0].mxu0 %v614
    %v713 = vpop.f32.mrb[0].mxu0
    %v714 = vadd.f32 %v665, %v713
    %v715 = vpop.f32.mrb[0].mxu0
    %v716 = vpop.f32.mrb[0].mxu0
    %v717 = vpop.f32.mrb[0].mxu0
    %718 = vdwg.mxu0
    %v719 = vsel %vm296, %v651, -inf
    %720 = vmax.xlane.f32.xlu0 %v719
    %v721 = vpop.xlane.xlu0 %720
    %v722 = vsub.f32 %v651, %v721
    %v723 = vmul.f32 %v722, 1.442695
    %v724 = vpow.pop %v723
    %v725 = vsel %vm296, %v724, 0.0
    %726 = vadd.xlane.f32.xlu0 %v725
    %v727 = vpop.xlane.xlu0 %726
    %v728 = vrcp.pop %v727
    %v729 = vmul.f32 %v724, %v728
    %v730 = vmul.f32 %v729, %v588
    %v731 = vsel %vm296, %v730, %v651
    %vm732 = vcmask 785408
    %733 = vst.msk [vmem:[#allocation27] sm:$0xff] %vm732, %v731
    %vm734 = vcmask 392192
    %735 = vst.msk [vmem:[#allocation29] sm:$0xff] %vm734, %v714
    %v736 = vmul.f32 %v651, 1.442695
    %v737 = vpow.pop %v736
    %v738 = vsub.f32 0.0, %v651
    %v739 = vmax.f32 %v738, 0.0
    %v740 = vand.u32 2147483647, %v738
    %v741 = vsub.f32 0.0, %v740
    %v742 = vmul.f32 %v741, 1.442695
    %v743 = vpow.pop %v742
    %v744 = vadd.f32 %v743, 1.0
    %v745 = vlog2.pop %v744
    %v746 = vmul.f32 %v745, 0.6931472
    %v747 = vadd.f32 %v739, %v746
    %v748 = vadd.f32 %v737, 1e-08
    %v749 = vlog2.pop %v748
    %v750 = vmul.f32 %v749, 0.6931472
    %752 = vrot.lane.b32.xlu0 %v730, 32
    %v753 = vpop.permute.xlu0 %752
    %v755 = vadd.f32 %v737, %v753
    %v756 = vadd.f32 %v755, 1e-08
    %v757 = vlog2.pop %v756
    %v758 = vmul.f32 %v757, 0.6931472
    %v759 = vsub.f32 %v750, %v758
    %v760 = vmul.f32 %v737, %v759
    %762 = vrot.lane.b32.xlu0 %v760, 32
    %v763 = vpop.permute.xlu0 %762
    %v765 = vadd.f32 %v738, %v763
    %v766 = vmax.f32 %v765, 0.0
    %v767 = vand.u32 2147483647, %v765
    %v768 = vsub.f32 0.0, %v767
    %v769 = vmul.f32 %v768, 1.442695
    %v770 = vpow.pop %v769
    %v771 = vadd.f32 %v770, 1.0
    %v772 = vlog2.pop %v771
    %v773 = vmul.f32 %v772, 0.6931472
    %v774 = vadd.f32 %v766, %v773
    %v775 = vsub.f32 %v774, %v747
    %vm776 = vcmp.lt.f32.partialorder %v207, 1e-08
    %778 = vrot.lane.b32.xlu0 %v775, 64
    %v779 = vpop.permute.xlu0 %778
    %v781 = vsel %vm776, %v779, 0.0
    %v782 = vsub.f32 0.0, %v747
    %v783 = vadd.f32 %v782, %v765
    %v784 = vadd.f32 %v730, 1e-08
    %v785 = vlog2.pop %v784
    %v786 = vmul.f32 %v785, 0.6931472
    %788 = vrot.lane.b32.xlu0 %v758, 96
    %v789 = vpop.permute.xlu0 %788
    %v791 = vsub.f32 %v786, %v789
    %v792 = vmul.f32 %v207, %v791
    %794 = vrot.lane.b32.xlu0 %v792, 64
    %v795 = vpop.permute.xlu0 %794
    %v797 = vadd.f32 %v783, %v795
    %799 = vrot.lane.b32.xlu0 %v737, 96
    %v800 = vpop.permute.xlu0 %799
    %v802 = vadd.f32 %v207, %v800
    %v803 = vadd.f32 %v802, 1.0
    %v804 = vmul.f32 %v802, %v803
    %v805 = vadd.f32 %v802, 2.0
    %v806 = vmul.f32 %v804, %v805
    %v807 = vadd.f32 %v802, 3.0
    %v808 = vmul.f32 %v806, %v807
    %v809 = vadd.f32 %v802, 4.0
    %v810 = vadd.f32 %v802, 5.0
    %v811 = vmul.f32 %v809, %v810
    %v812 = vadd.f32 %v802, 6.0
    %v813 = vmul.f32 %v811, %v812
    %v814 = vadd.f32 %v802, 7.0
    %v815 = vmul.f32 %v813, %v814
    %v816 = vlog2.pop %v808
    %v817 = vmul.f32 %v816, 0.6931472
    %v818 = vlog2.pop %v815
    %v819 = vmul.f32 %v818, 0.6931472
    %v820 = vadd.f32 %v817, %v819
    %v821 = vadd.f32 %v802, 8.0
    %v822 = vrcp.pop %v821
    %v823 = vmul.f32 %v822, %v822
    %v824 = vmul.f32 %v823, 0.0007936508
    %v825 = vsub.f32 0.0027777778, %v824
    %v826 = vmul.f32 %v823, %v825
    %v827 = vsub.f32 0.083333336, %v826
    %v828 = vmul.f32 %v822, %v827
    %v829 = vsub.f32 %v821, 0.5
    %v830 = vlog2.pop %v821
    %v831 = vmul.f32 %v830, 0.6931472
    %v832 = vmul.f32 %v829, %v831
    %v833 = vsub.f32 %v832, %v821
    %v834 = vadd.f32 %v833, 0.9189385
    %v835 = vadd.f32 %v834, %v828
    %v836 = vsub.f32 %v835, %v820
    %838 = vrot.lane.b32.xlu0 %v836, 64
    %v839 = vpop.permute.xlu0 %838
    %v841 = vadd.f32 %v797, %v839
    %v842 = vadd.f32 %v737, 1.0
    %v843 = vmul.f32 %v737, %v842
    %v844 = vadd.f32 %v737, 2.0
    %v845 = vmul.f32 %v843, %v844
    %v846 = vadd.f32 %v737, 3.0
    %v847 = vmul.f32 %v845, %v846
    %v848 = vadd.f32 %v737, 4.0
    %v849 = vadd.f32 %v737, 5.0
    %v850 = vmul.f32 %v848, %v849
    %v851 = vadd.f32 %v737, 6.0
    %v852 = vmul.f32 %v850, %v851
    %v853 = vadd.f32 %v737, 7.0
    %v854 = vmul.f32 %v852, %v853
    %v855 = vlog2.pop %v847
    %v856 = vmul.f32 %v855, 0.6931472
    %v857 = vlog2.pop %v854
    %v858 = vmul.f32 %v857, 0.6931472
    %v859 = vadd.f32 %v856, %v858
    %v860 = vadd.f32 %v737, 8.0
    %v861 = vrcp.pop %v860
    %v862 = vmul.f32 %v861, %v861
    %v863 = vmul.f32 %v862, 0.0007936508
    %v864 = vsub.f32 0.0027777778, %v863
    %v865 = vmul.f32 %v862, %v864
    %v866 = vsub.f32 0.083333336, %v865
    %v867 = vmul.f32 %v861, %v866
    %v868 = vsub.f32 %v860, 0.5
    %v869 = vlog2.pop %v860
    %v870 = vmul.f32 %v869, 0.6931472
    %v871 = vmul.f32 %v868, %v870
    %v872 = vsub.f32 %v871, %v860
    %v873 = vadd.f32 %v872, 0.9189385
    %v874 = vadd.f32 %v873, %v867
    %v875 = vsub.f32 %v874, %v859
    %877 = vrot.lane.b32.xlu0 %v875, 32
    %v878 = vpop.permute.xlu0 %877
    %v880 = vsub.f32 %v841, %v878
    %v881 = vld [vmem:[#allocation7] sm:$0xff]
    %883 = vrot.lane.b32.xlu0 %v881, 64
    %v884 = vpop.permute.xlu0 %883
    %v886 = vsub.f32 %v880, %v884
    %vm887 = vcmp.gt.f32.partialorder %v207, 1e-08
    %889 = vrot.lane.b32.xlu0 %v886, 64
    %v890 = vpop.permute.xlu0 %889
    %v892 = vsel %vm887, %v890, 0.0
    %v893 = vadd.f32 %v781, %v892
    %v894 = vsel %vm296, %v893, 0.0
    %895 = vadd.xlane.f32.xlu0 %v894
    %v896 = vpop.xlane.xlu0 %895
    %v897 = vsub.f32 0.0, %v896
    %898 = vst.msk [vmem:[%s25] sm:$0xff] %vm523, %v897
    %v899 = vmul.f32 %v714, 1.442695
    %v900 = vpow.pop %v899
    %v901 = vsub.f32 %v206, %v714
    %v902 = vadd.f32 %v714, 1.837877
    %v903 = vmul.f32 %v902, -0.5
    %v904 = vmul.f32 %v901, 0.5
    %v905 = vmul.f32 %v904, %v901
    %v906 = vrcp.pop %v900
    %908 = vrot.lane.b32.xlu0 %v906, 112
    %v909 = vpop.permute.xlu0 %908
    %v911 = vmul.f32 %v905, %v909
    %913 = vrot.lane.b32.xlu0 %v911, 16
    %v914 = vpop.permute.xlu0 %913
    %v916 = vsub.f32 %v903, %v914
    %918 = vrot.lane.b32.xlu0 %v916, 112
    %v919 = vpop.permute.xlu0 %918
    %v921 = vsel %vm227, %v919, 0.0
    %922 = vadd.xlane.f32.xlu0 %v921
    %v923 = vpop.xlane.xlu0 %922
    %v924 = vsub.f32 0.0, %v923
    %925 = vst.msk [vmem:[%s26] sm:$0xff] %vm523, %v924
    // Predicated region
    $region114: #{tpu_custom_call.1} parent=1 // pred_check
      _
    $region115: #{tpu_custom_call.1} parent=1 // pred_check_branch
      %927 = sbr.rel (0) target = $region117
    $region116: #{tpu_custom_call.1} parent=1 // pred_region
      %s929 = ssub.s32 128, 128
      %930 = vsyncadd [#allocation4], %s929
      %s932 = sshll.u32 [#allocation20], 4
      %s933 = int_to_ptr.vmem [resolvable:$true] %s932
      %935 = dma.vmem_to_hbm [thread:$0]  %s933, 128, %s17, [#allocation4]
    $region117: #{tpu_custom_call.1} parent=1 // pred_fallthru
      _
    // Predicated region
    $region118: #{tpu_custom_call.1} parent=1 // pred_check
      _
    $region119: #{tpu_custom_call.1} parent=1 // pred_check_branch
      %937 = sbr.rel (0) target = $region121
    $region120: #{tpu_custom_call.1} parent=1 // pred_region
      %s939 = ssub.s32 128, 128
      %940 = vsyncadd [#allocation22], %s939
      %s942 = sshll.u32 [#allocation21], 4
      %s943 = int_to_ptr.vmem [resolvable:$true] %s942
      %945 = dma.vmem_to_hbm [thread:$0]  %s943, 128, %s18, [#allocation22]
    $region121: #{tpu_custom_call.1} parent=1 // pred_fallthru
      _
    // Predicated region
    $region122: #{tpu_custom_call.1} parent=1 // pred_check
      _
    $region123: #{tpu_custom_call.1} parent=1 // pred_check_branch
      %947 = sbr.rel (0) target = $region125
    $region124: #{tpu_custom_call.1} parent=1 // pred_region
      %s949 = ssub.s32 128, 128
      %950 = vsyncadd [#allocation22], %s949
      %s952 = sshll.u32 [#allocation23], 4
      %s953 = int_to_ptr.vmem [resolvable:$true] %s952
      %955 = dma.vmem_to_hbm [thread:$0]  %s953, 128, %s19, [#allocation22]
    $region125: #{tpu_custom_call.1} parent=1 // pred_fallthru
      _
    // Predicated region
    $region126: #{tpu_custom_call.1} parent=1 // pred_check
      _
    $region127: #{tpu_custom_call.1} parent=1 // pred_check_branch
      %957 = sbr.rel (0) target = $region129
    $region128: #{tpu_custom_call.1} parent=1 // pred_region
      %s959 = ssub.s32 128, 128
      %960 = vsyncadd [#allocation25], %s959
      %s962 = sshll.u32 [#allocation24], 4
      %s963 = int_to_ptr.vmem [resolvable:$true] %s962
      %965 = dma.vmem_to_hbm [thread:$0]  %s963, 128, %s20, [#allocation25]
    $region129: #{tpu_custom_call.1} parent=1 // pred_fallthru
      _
    // Predicated region
    $region130: #{tpu_custom_call.1} parent=1 // pred_check
      _
    $region131: #{tpu_custom_call.1} parent=1 // pred_check_branch
      %967 = sbr.rel (0) target = $region133
    $region132: #{tpu_custom_call.1} parent=1 // pred_region
      %s969 = ssub.s32 128, 128
      %970 = vsyncadd [#allocation25], %s969
      %s972 = sshll.u32 [#allocation26], 4
      %s973 = int_to_ptr.vmem [resolvable:$true] %s972
      %975 = dma.vmem_to_hbm [thread:$0]  %s973, 128, %s21, [#allocation25]
    $region133: #{tpu_custom_call.1} parent=1 // pred_fallthru
      _
    // Predicated region
    $region134: #{tpu_custom_call.1} parent=1 // pred_check
      _
    $region135: #{tpu_custom_call.1} parent=1 // pred_check_branch
      %977 = sbr.rel (0) target = $region137
    $region136: #{tpu_custom_call.1} parent=1 // pred_region
      %s979 = ssub.s32 128, 128
      %980 = vsyncadd [#allocation28], %s979
      %s982 = sshll.u32 [#allocation27], 4
      %s983 = int_to_ptr.vmem [resolvable:$true] %s982
      %985 = dma.vmem_to_hbm [thread:$0]  %s983, 128, %s22, [#allocation28]
    $region137: #{tpu_custom_call.1} parent=1 // pred_fallthru
      _
    // Predicated region
    $region138: #{tpu_custom_call.1} parent=1 // pred_check
      _
    $region139: #{tpu_custom_call.1} parent=1 // pred_check_branch
      %987 = sbr.rel (0) target = $region141
    $region140: #{tpu_custom_call.1} parent=1 // pred_region
      %s989 = ssub.s32 128, 128
      %990 = vsyncadd [#allocation28], %s989
      %s992 = sshll.u32 [#allocation29], 4
      %s993 = int_to_ptr.vmem [resolvable:$true] %s992
      %995 = dma.vmem_to_hbm [thread:$0]  %s993, 128, %s23, [#allocation28]
    $region141: #{tpu_custom_call.1} parent=1 // pred_fallthru
      _
    // Predicated region
    $region142: #{tpu_custom_call.1} parent=1 // pred_check
      _
    $region143: #{tpu_custom_call.1} parent=1 // pred_check_branch
      %997 = sbr.rel (0) target = $region145
    $region144: #{tpu_custom_call.1} parent=1 // pred_region
      _
    $region145: #{tpu_custom_call.1} parent=1 // pred_fallthru
      _
    // Predicated region
    $region146: #{tpu_custom_call.1} parent=1 // pred_check
      _
    $region147: #{tpu_custom_call.1} parent=1 // pred_check_branch
      %999 = sbr.rel (0) target = $region149
    $region148: #{tpu_custom_call.1} parent=1 // pred_region
      _
    $region149: #{tpu_custom_call.1} parent=1 // pred_fallthru
      _
    // Predicated region
    $region150: #{tpu_custom_call.1} parent=1 // pred_check
      _
    $region151: #{tpu_custom_call.1} parent=1 // pred_check_branch
      %1001 = sbr.rel (0) target = $region153
    $region152: #{tpu_custom_call.1} parent=1 // pred_region
      _
    $region153: #{tpu_custom_call.1} parent=1 // pred_fallthru
      _
    // Predicated region
    $region154: #{tpu_custom_call.1} parent=1 // pred_check
      _
    $region155: #{tpu_custom_call.1} parent=1 // pred_check_branch
      %1003 = sbr.rel (0) target = $region157
    $region156: #{tpu_custom_call.1} parent=1 // pred_region
      %1004 = dma.done [#allocation4], 128
    $region157: #{tpu_custom_call.1} parent=1 // pred_fallthru
      _
    // Predicated region
    $region158: #{tpu_custom_call.1} parent=1 // pred_check
      _
    $region159: #{tpu_custom_call.1} parent=1 // pred_check_branch
      %1006 = sbr.rel (0) target = $region161
    $region160: #{tpu_custom_call.1} parent=1 // pred_region
      %1007 = dma.done [#allocation22], 128
    $region161: #{tpu_custom_call.1} parent=1 // pred_fallthru
      _
    // Predicated region
    $region162: #{tpu_custom_call.1} parent=1 // pred_check
      _
    $region163: #{tpu_custom_call.1} parent=1 // pred_check_branch
      %1009 = sbr.rel (0) target = $region165
    $region164: #{tpu_custom_call.1} parent=1 // pred_region
      %1010 = dma.done [#allocation22], 128
    $region165: #{tpu_custom_call.1} parent=1 // pred_fallthru
      _
    // Predicated region
    $region166: #{tpu_custom_call.1} parent=1 // pred_check
      _
    $region167: #{tpu_custom_call.1} parent=1 // pred_check_branch
      %1012 = sbr.rel (0) target = $region169
    $region168: #{tpu_custom_call.1} parent=1 // pred_region
      %1013 = dma.done [#allocation25], 128
    $region169: #{tpu_custom_call.1} parent=1 // pred_fallthru
      _
    // Predicated region
    $region170: #{tpu_custom_call.1} parent=1 // pred_check
      _
    $region171: #{tpu_custom_call.1} parent=1 // pred_check_branch
      %1015 = sbr.rel (0) target = $region173
    $region172: #{tpu_custom_call.1} parent=1 // pred_region
      %1016 = dma.done [#allocation25], 128
    $region173: #{tpu_custom_call.1} parent=1 // pred_fallthru
      _
    // Predicated region
    $region174: #{tpu_custom_call.1} parent=1 // pred_check
      _
    $region175: #{tpu_custom_call.1} parent=1 // pred_check_branch
      %1018 = sbr.rel (0) target = $region177
    $region176: #{tpu_custom_call.1} parent=1 // pred_region
      %1019 = dma.done [#allocation28], 128
    $region177: #{tpu_custom_call.1} parent=1 // pred_fallthru
      _
    // Predicated region
    $region178: #{tpu_custom_call.1} parent=1 // pred_check
      _
    $region179: #{tpu_custom_call.1} parent=1 // pred_check_branch
      %1021 = sbr.rel (0) target = $region181
    $region180: #{tpu_custom_call.1} parent=1 // pred_region
      %1022 = dma.done [#allocation28], 128
    $region181: #{tpu_custom_call.1} parent=1 // pred_fallthru
      _
    // Predicated region
    $region182: #{tpu_custom_call.1} parent=1 // pred_check
      _
    $region183: #{tpu_custom_call.1} parent=1 // pred_check_branch
      %1024 = sbr.rel (0) target = $region185
    $region184: #{tpu_custom_call.1} parent=1 // pred_region
      _
    $region185: #{tpu_custom_call.1} parent=1 // pred_fallthru
      _
    // Predicated region
    $region186: #{tpu_custom_call.1} parent=1 // pred_check
      _
    $region187: #{tpu_custom_call.1} parent=1 // pred_check_branch
      %1026 = sbr.rel (0) target = $region189
    $region188: #{tpu_custom_call.1} parent=1 // pred_region
      _
    $region189: #{tpu_custom_call.1} parent=1 // pred_fallthru
      _
    // Predicated region
    $region190: #{tpu_custom_call.1} parent=1 // pred_check
      _
    $region191: #{tpu_custom_call.1} parent=1 // pred_check_branch
      %1028 = sbr.rel (0) target = $region193
    $region192: #{tpu_custom_call.1} parent=1 // pred_region
      _
    $region193: #{tpu_custom_call.1} parent=1 // pred_fallthru
      _
    %1029 = vsyncpa [#allocation3], 1
    %1030 = vsyncpa [#allocation6], 1
    %1031 = vsyncpa [#allocation9], 1
    %1032 = vsyncpa [#allocation12], 1
    %1033 = vsyncpa [#allocation15], 1
    %1034 = vsyncpa [#allocation18], 1
    %1035 = vsyncpa [#allocation4], 1
    %1036 = vsyncpa [#allocation22], 1
    %1037 = vsyncpa [#allocation25], 1
    %1038 = vsyncpa [#allocation28], 1

</llo_original>
